<compile_context>
chip_gen: v5e
topology: v5e:2x2
jax: 0.10.0
libtpu: 0.0.40
codegen_flags: <defaults>
</compile_context>

<pallas_src>
import functools
import math

import jax
import jax.numpy as jnp
from jax.experimental import pallas as pl
from jax.experimental.pallas import tpu as pltpu


CFG = dict(vocab=64, type_vocab=2, max_pos=32, hidden=128, heads=4,
           intermediate=256, layers=2)

_LN_EPS = 1e-12


def _ln(x, g, b, eps):
    """LayerNorm over the last axis (x: (M, H) f32, g/b: (1, H) f32)."""
    mean = jnp.mean(x, axis=-1, keepdims=True)
    var = jnp.mean(jnp.square(x - mean), axis=-1, keepdims=True)
    return (x - mean) * jax.lax.rsqrt(var + eps) * g + b


# --------------------- fused encoder (+ embedding LN + pooling) kernel ---------------------

def _bert_kernel(emb_ref, bias_ref, poolw_ref, embg_ref, embb_ref,
                 wqkv_ref, bqkv_ref, wo_ref, bo_ref, ln1g_ref, ln1b_ref,
                 wi_ref, bi_ref, wo2_ref, bo2_ref, ln2g_ref, ln2b_ref,
                 o_ref, acc_ref, *, batch, seq, num_heads, head_dim, eps):
    layer = pl.program_id(0)
    H = num_heads * head_dim
    M = batch * seq

    # ---- l == 0: fold the embedding LayerNorm into this kernel and initialize the
    # resident hidden-state accumulator (stays in VMEM across all L grid steps).
    @pl.when(layer == 0)
    def _():
        acc_ref[...] = _ln(emb_ref[...], embg_ref[...], embb_ref[...], eps)

    h = acc_ref[...]                                    # (M, H) f32, M = B*S
    h_bf = h.astype(jnp.bfloat16)

    # ---- fused QKV projection: one lane-dense (M, H) x (H, 3H) MXU push, f32 acc.
    qkv = (jnp.dot(h_bf, wqkv_ref[0], preferred_element_type=jnp.float32)
           + bqkv_ref[0]).astype(jnp.bfloat16)          # (M, 3H) bf16

    # ---- head-batched self-attention over all B*S rows at once.
    # Heads become a leading batch axis; the batch boundary + key padding are enforced
    # by the precomputed (M, M) additive bias, so scores/PV are single batched einsums.
    def split_heads(x):                                 # (M, NH*hd) -> (NH, M, hd)
        return jnp.stack(
            [x[:, i * head_dim:(i + 1) * head_dim] for i in range(num_heads)], axis=0)

    q = split_heads(qkv[:, :H])          # 1/sqrt(head_dim) already folded into Wq
    k = split_heads(qkv[:, H:2 * H])
    v = split_heads(qkv[:, 2 * H:])

    s = jnp.einsum("hqd,hkd->hqk", q, k,
                   preferred_element_type=jnp.float32) + bias_ref[...]   # (NH, M, M)
    s = s - jnp.max(s, axis=-1, keepdims=True)
    p = jnp.exp(s)
    p = p * pl.reciprocal(jnp.sum(p, axis=-1, keepdims=True), approx=True)
    ctx = jnp.einsum("hqk,hkd->hqd", p.astype(jnp.bfloat16), v,
                     preferred_element_type=jnp.float32).astype(jnp.bfloat16)

    # ---- head merge fused into the output projection: per-head (hd, H) blocks of Wo,
    # one batched einsum + head sum (no lane-axis concatenate relayout).
    proj = jnp.einsum("hmd,hdo->hmo", ctx, wo_ref[0],
                      preferred_element_type=jnp.float32)                # (NH, M, H)
    attn = bo_ref[0]
    for hh in range(num_heads):
        attn = attn + proj[hh]
    h1 = _ln(attn + h, ln1g_ref[0], ln1b_ref[0], eps)                    # (M, H) f32

    # ---- FFN (intermediate never leaves VMEM) + residual + LayerNorm.
    inter = jnp.dot(h1.astype(jnp.bfloat16), wi_ref[0],
                    preferred_element_type=jnp.float32) + bi_ref[0]
    # TODO(synk): HF BERT uses exact erf-GELU; tanh approximation used here.
    inter = jax.nn.gelu(inter, approximate=True).astype(jnp.bfloat16)
    ffn = jnp.dot(inter, wo2_ref[0],
                  preferred_element_type=jnp.float32) + bo2_ref[0]
    h2 = _ln(ffn + h1, ln2g_ref[0], ln2b_ref[0], eps)

    acc_ref[...] = h2                                   # carry to the next layer (VMEM)

    # ---- l == L-1: fused attention-mask-weighted mean pooling -> (B, H) output.
    @pl.when(layer == pl.num_programs(0) - 1)
    def _():
        pooled = jnp.sum((h2 * poolw_ref[...]).reshape(batch, seq, H), axis=1)
        o_ref[...] = pooled.astype(o_ref.dtype)


def bert_encoder_pool(emb2d, attn_bias, pool_w, params, cfg, batch, seq):
    M, H = emb2d.shape
    L = cfg["layers"]
    NH = cfg["heads"]
    HD = H // NH
    I = cfg["intermediate"]
    st = params["stack"]
    kern = functools.partial(_bert_kernel, batch=batch, seq=seq,
                             num_heads=NH, head_dim=HD, eps=_LN_EPS)

    def const(shape):
        n = len(shape)
        return pl.BlockSpec(shape, lambda l, n=n: (0,) * n)

    def stacked(shape):
        n = len(shape)
        return pl.BlockSpec((1,) + shape, lambda l, n=n: (l,) + (0,) * n)

    # TODO(synk): at bert-base scale (H=768, S=512) tile M and the KV axis (flash-style
    # online softmax instead of the dense (M, M) bias), and set vmem_limit_bytes so the
    # fused layer fits v7x's 64 MiB VMEM; at toy size whole-model blocks fit trivially.
    return pl.pallas_call(
        kern,
        out_shape=jax.ShapeDtypeStruct((batch, H), jnp.float32),
        grid=(L,),
        in_specs=[
            const((M, H)),                               # summed embeddings (pre-LN)
            const((M, M)),                               # block-diag + key-pad additive bias
            const((M, 1)),                               # pooling weights mask/clamp(sum mask)
            const((1, H)), const((1, H)),                # embedding LayerNorm
            stacked((H, 3 * H)), stacked((1, 3 * H)),    # fused QKV proj (streamed over L)
            stacked((NH, HD, H)), stacked((1, H)),       # attn out proj (per-head blocks)
            stacked((1, H)), stacked((1, H)),            # LN1
            stacked((H, I)), stacked((1, I)),            # FFN in
            stacked((I, H)), stacked((1, H)),            # FFN out
            stacked((1, H)), stacked((1, H)),            # LN2
        ],
        out_specs=pl.BlockSpec((batch, H), lambda l: (0, 0)),
        scratch_shapes=[pltpu.VMEM((M, H), jnp.float32)],   # resident hidden state
        compiler_params=pltpu.CompilerParams(dimension_semantics=("arbitrary",)),
    )(emb2d, attn_bias, pool_w,
      params["emb_ln_g"], params["emb_ln_b"],
      st["wqkv"], st["bqkv"], st["wo"], st["bo"], st["ln1_g"], st["ln1_b"],
      st["wi"], st["bi"], st["wo2"], st["bo2"], st["ln2_g"], st["ln2_b"])


# ----------------------------- params / forward (XLA glue) -----------------------------

def init_params(key, cfg):
    H, I, L = cfg["hidden"], cfg["intermediate"], cfg["layers"]
    NH = cfg["heads"]
    HD = H // NH

    def norm(k, shape, scale=0.02):
        return (scale * jax.random.normal(k, shape)).astype(jnp.float32)

    keys = iter(jax.random.split(key, 3 + L * 6))
    params = dict(
        word_emb=norm(next(keys), (cfg["vocab"], H)),
        pos_emb=norm(next(keys), (cfg["max_pos"], H)),
        type_emb=norm(next(keys), (cfg["type_vocab"], H)),
        emb_ln_g=jnp.ones((1, H), jnp.float32),
        emb_ln_b=jnp.zeros((1, H), jnp.float32),
    )

    names = ("wqkv", "bqkv", "wo", "bo", "ln1_g", "ln1_b",
             "wi", "bi", "wo2", "bo2", "ln2_g", "ln2_b")
    acc = {n: [] for n in names}
    q_scale = 1.0 / math.sqrt(HD)
    for _ in range(L):
        # 1/sqrt(head_dim) folded into the Q projection (its bias is zero here).
        wq = norm(next(keys), (H, H)) * q_scale
        wk = norm(next(keys), (H, H))
        wv = norm(next(keys), (H, H))
        acc["wqkv"].append(jnp.concatenate([wq, wk, wv], axis=1))        # (H, 3H)
        acc["bqkv"].append(jnp.zeros((1, 3 * H), jnp.float32))
        acc["wo"].append(norm(next(keys), (H, H)).reshape(NH, HD, H))    # per-head blocks
        acc["bo"].append(jnp.zeros((1, H), jnp.float32))
        acc["ln1_g"].append(jnp.ones((1, H), jnp.float32))
        acc["ln1_b"].append(jnp.zeros((1, H), jnp.float32))
        acc["wi"].append(norm(next(keys), (H, I)))
        acc["bi"].append(jnp.zeros((1, I), jnp.float32))
        acc["wo2"].append(norm(next(keys), (I, H)))
        acc["bo2"].append(jnp.zeros((1, H), jnp.float32))
        acc["ln2_g"].append(jnp.ones((1, H), jnp.float32))
        acc["ln2_b"].append(jnp.zeros((1, H), jnp.float32))

    bf16 = ("wqkv", "wo", "wi", "wo2")   # matmul weights in bf16 (f32 accumulation in-kernel)
    params["stack"] = {
        n: jnp.stack(v).astype(jnp.bfloat16 if n in bf16 else jnp.float32)
        for n, v in acc.items()
    }
    return params


def bert_only_forward(params, cfg, input_ids, token_type_ids, attention_mask):
    B, S = input_ids.shape
    H = cfg["hidden"]
    M = B * S

    # Embeddings: data-dependent gathers + sum stay in XLA; the embedding LayerNorm is
    # fused into the first grid step of the Pallas kernel.
    pos = jnp.arange(S)
    emb = (jnp.take(params["word_emb"], input_ids, axis=0)
           + jnp.take(params["pos_emb"], pos, axis=0)[None, :, :]
           + jnp.take(params["type_emb"], token_type_ids, axis=0))        # (B, S, H)
    emb2d = emb.reshape(M, H)

    # Mask-derived tensors (tiny, computed once in XLA):
    #  * block-diagonal (per-batch) + key-padding additive attention bias over the folded
    #    M = B*S rows (BERT-style -10000 on disallowed keys; exact zero weight after softmax),
    #  * per-token pooling weights mask / clamp(sum(mask), 1e-9)  (torch semantics).
    mask_f = attention_mask.astype(jnp.float32)                           # (B, S)
    batch_ids = jnp.repeat(jnp.arange(B), S)                              # (M,)
    allowed = ((batch_ids[:, None] == batch_ids[None, :])
               & (mask_f.reshape(M)[None, :] > 0.5))
    attn_bias = jnp.where(allowed, 0.0, -10000.0).astype(jnp.float32)     # (M, M)
    cnt = jnp.maximum(jnp.sum(mask_f, axis=1, keepdims=True), 1e-9)       # (B, 1)
    pool_w = (mask_f / cnt).reshape(M, 1)                                 # (M, 1)

    return bert_encoder_pool(emb2d, attn_bias, pool_w, params, cfg, B, S)


if __name__ == "__main__":
    key = jax.random.PRNGKey(0)
    pkey, ikey = jax.random.split(key)
    params = init_params(pkey, CFG)

    B, S = 2, 8
    input_ids = jax.random.randint(ikey, (B, S), 0, CFG["vocab"], dtype=jnp.int32)
    token_type_ids = jnp.zeros((B, S), jnp.int32)
    attention_mask = jnp.array([[1, 1, 1, 1, 1, 1, 1, 1],
                                [1, 1, 1, 1, 1, 0, 0, 0]], dtype=jnp.int32)

    @jax.jit
    def forward(p, ids, tt, am):
        return bert_only_forward(p, CFG, ids, tt, am)

    out = forward(params, input_ids, token_type_ids, attention_mask)
    out = jax.block_until_ready(out)
    assert out.shape == (B, CFG["hidden"])
    assert bool(jnp.all(jnp.isfinite(out)))
    print("KERNEL_OK")
</pallas_src>

<mosaic_0001>
module attributes {stable_mosaic.version = 11 : i64} {
  func.func @_bert_kernel(%arg0: i32, %arg1: memref<16x128xf32, #tpu.memory_space<vmem>>, %arg2: memref<16x16xf32, #tpu.memory_space<vmem>>, %arg3: memref<16x1xf32, #tpu.memory_space<vmem>>, %arg4: memref<1x128xf32, #tpu.memory_space<vmem>>, %arg5: memref<1x128xf32, #tpu.memory_space<vmem>>, %arg6: memref<1x128x384xbf16, #tpu.memory_space<vmem>>, %arg7: memref<1x1x384xf32, #tpu.memory_space<vmem>>, %arg8: memref<1x4x32x128xbf16, #tpu.memory_space<vmem>>, %arg9: memref<1x1x128xf32, #tpu.memory_space<vmem>>, %arg10: memref<1x1x128xf32, #tpu.memory_space<vmem>>, %arg11: memref<1x1x128xf32, #tpu.memory_space<vmem>>, %arg12: memref<1x128x256xbf16, #tpu.memory_space<vmem>>, %arg13: memref<1x1x256xf32, #tpu.memory_space<vmem>>, %arg14: memref<1x256x128xbf16, #tpu.memory_space<vmem>>, %arg15: memref<1x1x128xf32, #tpu.memory_space<vmem>>, %arg16: memref<1x1x128xf32, #tpu.memory_space<vmem>>, %arg17: memref<1x1x128xf32, #tpu.memory_space<vmem>>, %arg18: memref<2x128xf32, #tpu.memory_space<vmem>>, %arg19: memref<16x128xf32, #tpu.memory_space<vmem>>) attributes {dimension_semantics = [#tpu.dimension_semantics<arbitrary>], iteration_bounds = array<i64: 2>, scalar_prefetch = 0 : i64, scratch_operands = 1 : i64, tpu.core_type = #tpu.core_type<tc>, window_params = [{pipeline_mode = #tpu.pipeline_mode<synchronous>, transform_indices = @transform_0, window_bounds = array<i64: 16, 128>}, {pipeline_mode = #tpu.pipeline_mode<synchronous>, transform_indices = @transform_1, window_bounds = array<i64: 16, 16>}, {pipeline_mode = #tpu.pipeline_mode<synchronous>, transform_indices = @transform_2, window_bounds = array<i64: 16, 1>}, {pipeline_mode = #tpu.pipeline_mode<synchronous>, transform_indices = @transform_3, window_bounds = array<i64: 1, 128>}, {pipeline_mode = #tpu.pipeline_mode<synchronous>, transform_indices = @transform_4, window_bounds = array<i64: 1, 128>}, {transform_indices = @transform_5, window_bounds = array<i64: 1, 128, 384>}, {transform_indices = @transform_6, window_bounds = array<i64: 1, 1, 384>}, {transform_indices = @transform_7, window_bounds = array<i64: 1, 4, 32, 128>}, {transform_indices = @transform_8, window_bounds = array<i64: 1, 1, 128>}, {transform_indices = @transform_9, window_bounds = array<i64: 1, 1, 128>}, {transform_indices = @transform_10, window_bounds = array<i64: 1, 1, 128>}, {transform_indices = @transform_11, window_bounds = array<i64: 1, 128, 256>}, {transform_indices = @transform_12, window_bounds = array<i64: 1, 1, 256>}, {transform_indices = @transform_13, window_bounds = array<i64: 1, 256, 128>}, {transform_indices = @transform_14, window_bounds = array<i64: 1, 1, 128>}, {transform_indices = @transform_15, window_bounds = array<i64: 1, 1, 128>}, {transform_indices = @transform_16, window_bounds = array<i64: 1, 1, 128>}, {pipeline_mode = #tpu.pipeline_mode<synchronous>, transform_indices = @transform_17, window_bounds = array<i64: 2, 128>}]} {
    %c0_i32 = arith.constant 0 : i32
    %0 = arith.cmpi eq, %arg0, %c0_i32 : i32
    %1 = arith.extui %0 : i1 to i32
    %c0_i32_0 = arith.constant 0 : i32
    %2 = arith.cmpi ne, %1, %c0_i32_0 : i32
    scf.if %2 {
      %c0_65 = arith.constant 0 : index
      %c0_66 = arith.constant 0 : index
      %166 = vector.load %arg1[%c0_65, %c0_66] : memref<16x128xf32, #tpu.memory_space<vmem>>, vector<16x128xf32>
      %c0_67 = arith.constant 0 : index
      %c0_68 = arith.constant 0 : index
      %167 = vector.load %arg4[%c0_67, %c0_68] : memref<1x128xf32, #tpu.memory_space<vmem>>, vector<1x128xf32>
      %c0_69 = arith.constant 0 : index
      %c0_70 = arith.constant 0 : index
      %168 = vector.load %arg5[%c0_69, %c0_70] : memref<1x128xf32, #tpu.memory_space<vmem>>, vector<1x128xf32>
      %cst_71 = arith.constant dense<0.000000e+00> : vector<16xf32>
      %169 = vector.multi_reduction <add>, %166, %cst_71 [1] : vector<16x128xf32> to vector<16xf32>
      %170 = vector.shape_cast %169 : vector<16xf32> to vector<16x1xf32>
      %cst_72 = arith.constant 1.280000e+02 : f32
      %171 = vector.broadcast %cst_72 : f32 to vector<16x1xf32>
      %172 = arith.divf %170, %171 : vector<16x1xf32>
      %173 = vector.broadcast %172 : vector<16x1xf32> to vector<16x128xf32>
      %174 = arith.subf %166, %173 : vector<16x128xf32>
      %175 = arith.mulf %174, %174 : vector<16x128xf32>
      %cst_73 = arith.constant dense<0.000000e+00> : vector<16xf32>
      %176 = vector.multi_reduction <add>, %175, %cst_73 [1] : vector<16x128xf32> to vector<16xf32>
      %177 = vector.shape_cast %176 : vector<16xf32> to vector<16x1xf32>
      %cst_74 = arith.constant 1.280000e+02 : f32
      %178 = vector.broadcast %cst_74 : f32 to vector<16x1xf32>
      %179 = arith.divf %177, %178 : vector<16x1xf32>
      %180 = vector.broadcast %172 : vector<16x1xf32> to vector<16x128xf32>
      %181 = arith.subf %166, %180 : vector<16x128xf32>
      %cst_75 = arith.constant 9.99999996E-13 : f32
      %182 = vector.broadcast %cst_75 : f32 to vector<16x1xf32>
      %183 = arith.addf %179, %182 : vector<16x1xf32>
      %184 = math.rsqrt %183 : vector<16x1xf32>
      %185 = vector.broadcast %184 : vector<16x1xf32> to vector<16x128xf32>
      %186 = arith.mulf %181, %185 : vector<16x128xf32>
      %187 = vector.broadcast %167 : vector<1x128xf32> to vector<16x128xf32>
      %188 = arith.mulf %186, %187 : vector<16x128xf32>
      %189 = vector.broadcast %168 : vector<1x128xf32> to vector<16x128xf32>
      %190 = arith.addf %188, %189 : vector<16x128xf32>
      %c0_76 = arith.constant 0 : index
      %c0_77 = arith.constant 0 : index
      %191 = vector.load %arg19[%c0_76, %c0_77] : memref<16x128xf32, #tpu.memory_space<vmem>>, vector<16x128xf32>
      tpu.vector_store %arg19[%c0_76, %c0_77], %190 {strides = array<i32>} : memref<16x128xf32, #tpu.memory_space<vmem>>, vector<16x128xf32>,
    } else {
    }
    %c0 = arith.constant 0 : index
    %c0_1 = arith.constant 0 : index
    %3 = vector.load %arg19[%c0, %c0_1] : memref<16x128xf32, #tpu.memory_space<vmem>>, vector<16x128xf32>
    %4 = arith.truncf %3 : vector<16x128xf32> to vector<16x128xbf16>
    %c0_2 = arith.constant 0 : index
    %c0_3 = arith.constant 0 : index
    %c0_4 = arith.constant 0 : index
    %5 = vector.load %arg6[%c0_2, %c0_3, %c0_4] : memref<1x128x384xbf16, #tpu.memory_space<vmem>>, vector<1x128x384xbf16>
    %6 = vector.shape_cast %5 : vector<1x128x384xbf16> to vector<128x384xbf16>
    %cst = arith.constant dense<0.000000e+00> : vector<16x384xf32>
    %7 = tpu.matmul %4, %6, %cst {dimension_numbers = #tpu.dot_dimension_numbers<[1], [0], [0], [1], [0, 0, 1, 1], [], []>} : vector<16x128xbf16>, vector<128x384xbf16>, vector<16x384xf32> -> vector<16x384xf32>
    %c0_5 = arith.constant 0 : index
    %c0_6 = arith.constant 0 : index
    %c0_7 = arith.constant 0 : index
    %8 = vector.load %arg7[%c0_5, %c0_6, %c0_7] : memref<1x1x384xf32, #tpu.memory_space<vmem>>, vector<1x1x384xf32>
    %9 = vector.shape_cast %8 : vector<1x1x384xf32> to vector<1x384xf32>
    %10 = vector.broadcast %9 : vector<1x384xf32> to vector<16x384xf32>
    %11 = arith.addf %7, %10 : vector<16x384xf32>
    %12 = arith.truncf %11 : vector<16x384xf32> to vector<16x384xbf16>
    %13 = vector.extract_strided_slice %12 {offsets = [0, 0], sizes = [16, 128], strides = [1, 1]} : vector<16x384xbf16> to vector<16x128xbf16>
    %14 = vector.extract_strided_slice %13 {offsets = [0, 0], sizes = [16, 32], strides = [1, 1]} : vector<16x128xbf16> to vector<16x32xbf16>
    %15 = vector.extract_strided_slice %13 {offsets = [0, 32], sizes = [16, 32], strides = [1, 1]} : vector<16x128xbf16> to vector<16x32xbf16>
    %16 = vector.extract_strided_slice %13 {offsets = [0, 64], sizes = [16, 32], strides = [1, 1]} : vector<16x128xbf16> to vector<16x32xbf16>
    %17 = vector.extract_strided_slice %13 {offsets = [0, 96], sizes = [16, 32], strides = [1, 1]} : vector<16x128xbf16> to vector<16x32xbf16>
    %18 = vector.shape_cast %14 : vector<16x32xbf16> to vector<1x16x32xbf16>
    %19 = vector.shape_cast %15 : vector<16x32xbf16> to vector<1x16x32xbf16>
    %20 = vector.shape_cast %16 : vector<16x32xbf16> to vector<1x16x32xbf16>
    %21 = vector.shape_cast %17 : vector<16x32xbf16> to vector<1x16x32xbf16>
    %22 = tpu.concatenate %18, %19, %20, %21 in 0 : vector<1x16x32xbf16>, vector<1x16x32xbf16>, vector<1x16x32xbf16>, vector<1x16x32xbf16> -> vector<4x16x32xbf16>
    %23 = vector.extract_strided_slice %12 {offsets = [0, 128], sizes = [16, 128], strides = [1, 1]} : vector<16x384xbf16> to vector<16x128xbf16>
    %24 = vector.extract_strided_slice %23 {offsets = [0, 0], sizes = [16, 32], strides = [1, 1]} : vector<16x128xbf16> to vector<16x32xbf16>
    %25 = vector.extract_strided_slice %23 {offsets = [0, 32], sizes = [16, 32], strides = [1, 1]} : vector<16x128xbf16> to vector<16x32xbf16>
    %26 = vector.extract_strided_slice %23 {offsets = [0, 64], sizes = [16, 32], strides = [1, 1]} : vector<16x128xbf16> to vector<16x32xbf16>
    %27 = vector.extract_strided_slice %23 {offsets = [0, 96], sizes = [16, 32], strides = [1, 1]} : vector<16x128xbf16> to vector<16x32xbf16>
    %28 = vector.shape_cast %24 : vector<16x32xbf16> to vector<1x16x32xbf16>
    %29 = vector.shape_cast %25 : vector<16x32xbf16> to vector<1x16x32xbf16>
    %30 = vector.shape_cast %26 : vector<16x32xbf16> to vector<1x16x32xbf16>
    %31 = vector.shape_cast %27 : vector<16x32xbf16> to vector<1x16x32xbf16>
    %32 = tpu.concatenate %28, %29, %30, %31 in 0 : vector<1x16x32xbf16>, vector<1x16x32xbf16>, vector<1x16x32xbf16>, vector<1x16x32xbf16> -> vector<4x16x32xbf16>
    %33 = vector.extract_strided_slice %12 {offsets = [0, 256], sizes = [16, 128], strides = [1, 1]} : vector<16x384xbf16> to vector<16x128xbf16>
    %34 = vector.extract_strided_slice %33 {offsets = [0, 0], sizes = [16, 32], strides = [1, 1]} : vector<16x128xbf16> to vector<16x32xbf16>
    %35 = vector.extract_strided_slice %33 {offsets = [0, 32], sizes = [16, 32], strides = [1, 1]} : vector<16x128xbf16> to vector<16x32xbf16>
    %36 = vector.extract_strided_slice %33 {offsets = [0, 64], sizes = [16, 32], strides = [1, 1]} : vector<16x128xbf16> to vector<16x32xbf16>
    %37 = vector.extract_strided_slice %33 {offsets = [0, 96], sizes = [16, 32], strides = [1, 1]} : vector<16x128xbf16> to vector<16x32xbf16>
    %38 = vector.shape_cast %34 : vector<16x32xbf16> to vector<1x16x32xbf16>
    %39 = vector.shape_cast %35 : vector<16x32xbf16> to vector<1x16x32xbf16>
    %40 = vector.shape_cast %36 : vector<16x32xbf16> to vector<1x16x32xbf16>
    %41 = vector.shape_cast %37 : vector<16x32xbf16> to vector<1x16x32xbf16>
    %42 = tpu.concatenate %38, %39, %40, %41 in 0 : vector<1x16x32xbf16>, vector<1x16x32xbf16>, vector<1x16x32xbf16>, vector<1x16x32xbf16> -> vector<4x16x32xbf16>
    "tpu.trace_start"() <{level = 10 : i32, message = "hqd,hkd->hqk"}> : () -> ()
    %cst_8 = arith.constant dense<0.000000e+00> : vector<4x16x16xf32>
    %43 = tpu.matmul %22, %32, %cst_8 {dimension_numbers = #tpu.dot_dimension_numbers<[2], [2], [1], [1], [0, 0, 0, 1, 1, 1], [0], [0]>} : vector<4x16x32xbf16>, vector<4x16x32xbf16>, vector<4x16x16xf32> -> vector<4x16x16xf32>
    "tpu.trace_stop"() : () -> ()
    %c0_9 = arith.constant 0 : index
    %c0_10 = arith.constant 0 : index
    %44 = vector.load %arg2[%c0_9, %c0_10] : memref<16x16xf32, #tpu.memory_space<vmem>>, vector<16x16xf32>
    %45 = vector.shape_cast %44 : vector<16x16xf32> to vector<1x16x16xf32>
    %46 = vector.broadcast %45 : vector<1x16x16xf32> to vector<4x16x16xf32>
    %47 = arith.addf %43, %46 : vector<4x16x16xf32>
    %cst_11 = arith.constant dense<0xFF800000> : vector<4x16xf32>
    %48 = vector.multi_reduction <maximumf>, %47, %cst_11 [2] : vector<4x16x16xf32> to vector<4x16xf32>
    %49 = vector.shape_cast %48 : vector<4x16xf32> to vector<4x16x1xf32>
    %50 = vector.broadcast %49 : vector<4x16x1xf32> to vector<4x16x16xf32>
    %51 = arith.subf %47, %50 : vector<4x16x16xf32>
    %52 = math.exp %51 : vector<4x16x16xf32>
    %cst_12 = arith.constant dense<0.000000e+00> : vector<4x16xf32>
    %53 = vector.multi_reduction <add>, %52, %cst_12 [2] : vector<4x16x16xf32> to vector<4x16xf32>
    %54 = vector.shape_cast %53 : vector<4x16xf32> to vector<4x16x1xf32>
    %55 = tpu.reciprocal %54 {approx = true} : vector<4x16x1xf32> -> vector<4x16x1xf32>
    %56 = vector.broadcast %55 : vector<4x16x1xf32> to vector<4x16x16xf32>
    %57 = arith.mulf %52, %56 : vector<4x16x16xf32>
    %58 = arith.truncf %57 : vector<4x16x16xf32> to vector<4x16x16xbf16>
    "tpu.trace_start"() <{level = 10 : i32, message = "hqk,hkd->hqd"}> : () -> ()
    %cst_13 = arith.constant dense<0.000000e+00> : vector<4x16x32xf32>
    %59 = tpu.matmul %58, %42, %cst_13 {dimension_numbers = #tpu.dot_dimension_numbers<[2], [1], [1], [2], [0, 0, 0, 1, 1, 2], [0], [0]>} : vector<4x16x16xbf16>, vector<4x16x32xbf16>, vector<4x16x32xf32> -> vector<4x16x32xf32>
    "tpu.trace_stop"() : () -> ()
    %60 = arith.truncf %59 : vector<4x16x32xf32> to vector<4x16x32xbf16>
    %c0_14 = arith.constant 0 : index
    %c0_15 = arith.constant 0 : index
    %c0_16 = arith.constant 0 : index
    %c0_17 = arith.constant 0 : index
    %61 = vector.load %arg8[%c0_14, %c0_15, %c0_16, %c0_17] : memref<1x4x32x128xbf16, #tpu.memory_space<vmem>>, vector<1x4x32x128xbf16>
    %62 = vector.shape_cast %61 : vector<1x4x32x128xbf16> to vector<4x32x128xbf16>
    "tpu.trace_start"() <{level = 10 : i32, message = "hmd,hdo->hmo"}> : () -> ()
    %cst_18 = arith.constant dense<0.000000e+00> : vector<4x16x128xf32>
    %63 = tpu.matmul %60, %62, %cst_18 {dimension_numbers = #tpu.dot_dimension_numbers<[2], [1], [1], [2], [0, 0, 0, 1, 1, 2], [0], [0]>} : vector<4x16x32xbf16>, vector<4x32x128xbf16>, vector<4x16x128xf32> -> vector<4x16x128xf32>
    "tpu.trace_stop"() : () -> ()
    %c0_19 = arith.constant 0 : index
    %c0_20 = arith.constant 0 : index
    %c0_21 = arith.constant 0 : index
    %64 = vector.load %arg9[%c0_19, %c0_20, %c0_21] : memref<1x1x128xf32, #tpu.memory_space<vmem>>, vector<1x1x128xf32>
    %65 = vector.shape_cast %64 : vector<1x1x128xf32> to vector<1x128xf32>
    %66 = vector.extract_strided_slice %63 {offsets = [0, 0, 0], sizes = [1, 16, 128], strides = [1, 1, 1]} : vector<4x16x128xf32> to vector<1x16x128xf32>
    %67 = vector.shape_cast %66 : vector<1x16x128xf32> to vector<16x128xf32>
    %68 = vector.broadcast %65 : vector<1x128xf32> to vector<16x128xf32>
    %69 = arith.addf %68, %67 : vector<16x128xf32>
    %70 = vector.extract_strided_slice %63 {offsets = [1, 0, 0], sizes = [1, 16, 128], strides = [1, 1, 1]} : vector<4x16x128xf32> to vector<1x16x128xf32>
    %71 = vector.shape_cast %70 : vector<1x16x128xf32> to vector<16x128xf32>
    %72 = arith.addf %69, %71 : vector<16x128xf32>
    %73 = vector.extract_strided_slice %63 {offsets = [2, 0, 0], sizes = [1, 16, 128], strides = [1, 1, 1]} : vector<4x16x128xf32> to vector<1x16x128xf32>
    %74 = vector.shape_cast %73 : vector<1x16x128xf32> to vector<16x128xf32>
    %75 = arith.addf %72, %74 : vector<16x128xf32>
    %76 = vector.extract_strided_slice %63 {offsets = [3, 0, 0], sizes = [1, 16, 128], strides = [1, 1, 1]} : vector<4x16x128xf32> to vector<1x16x128xf32>
    %77 = vector.shape_cast %76 : vector<1x16x128xf32> to vector<16x128xf32>
    %78 = arith.addf %75, %77 : vector<16x128xf32>
    %79 = arith.addf %78, %3 : vector<16x128xf32>
    %c0_22 = arith.constant 0 : index
    %c0_23 = arith.constant 0 : index
    %c0_24 = arith.constant 0 : index
    %80 = vector.load %arg10[%c0_22, %c0_23, %c0_24] : memref<1x1x128xf32, #tpu.memory_space<vmem>>, vector<1x1x128xf32>
    %81 = vector.shape_cast %80 : vector<1x1x128xf32> to vector<1x128xf32>
    %c0_25 = arith.constant 0 : index
    %c0_26 = arith.constant 0 : index
    %c0_27 = arith.constant 0 : index
    %82 = vector.load %arg11[%c0_25, %c0_26, %c0_27] : memref<1x1x128xf32, #tpu.memory_space<vmem>>, vector<1x1x128xf32>
    %83 = vector.shape_cast %82 : vector<1x1x128xf32> to vector<1x128xf32>
    %cst_28 = arith.constant dense<0.000000e+00> : vector<16xf32>
    %84 = vector.multi_reduction <add>, %79, %cst_28 [1] : vector<16x128xf32> to vector<16xf32>
    %85 = vector.shape_cast %84 : vector<16xf32> to vector<16x1xf32>
    %cst_29 = arith.constant 1.280000e+02 : f32
    %86 = vector.broadcast %cst_29 : f32 to vector<16x1xf32>
    %87 = arith.divf %85, %86 : vector<16x1xf32>
    %88 = vector.broadcast %87 : vector<16x1xf32> to vector<16x128xf32>
    %89 = arith.subf %79, %88 : vector<16x128xf32>
    %90 = arith.mulf %89, %89 : vector<16x128xf32>
    %cst_30 = arith.constant dense<0.000000e+00> : vector<16xf32>
    %91 = vector.multi_reduction <add>, %90, %cst_30 [1] : vector<16x128xf32> to vector<16xf32>
    %92 = vector.shape_cast %91 : vector<16xf32> to vector<16x1xf32>
    %cst_31 = arith.constant 1.280000e+02 : f32
    %93 = vector.broadcast %cst_31 : f32 to vector<16x1xf32>
    %94 = arith.divf %92, %93 : vector<16x1xf32>
    %95 = vector.broadcast %87 : vector<16x1xf32> to vector<16x128xf32>
    %96 = arith.subf %79, %95 : vector<16x128xf32>
    %cst_32 = arith.constant 9.99999996E-13 : f32
    %97 = vector.broadcast %cst_32 : f32 to vector<16x1xf32>
    %98 = arith.addf %94, %97 : vector<16x1xf32>
    %99 = math.rsqrt %98 : vector<16x1xf32>
    %100 = vector.broadcast %99 : vector<16x1xf32> to vector<16x128xf32>
    %101 = arith.mulf %96, %100 : vector<16x128xf32>
    %102 = vector.broadcast %81 : vector<1x128xf32> to vector<16x128xf32>
    %103 = arith.mulf %101, %102 : vector<16x128xf32>
    %104 = vector.broadcast %83 : vector<1x128xf32> to vector<16x128xf32>
    %105 = arith.addf %103, %104 : vector<16x128xf32>
    %106 = arith.truncf %105 : vector<16x128xf32> to vector<16x128xbf16>
    %c0_33 = arith.constant 0 : index
    %c0_34 = arith.constant 0 : index
    %c0_35 = arith.constant 0 : index
    %107 = vector.load %arg12[%c0_33, %c0_34, %c0_35] : memref<1x128x256xbf16, #tpu.memory_space<vmem>>, vector<1x128x256xbf16>
    %108 = vector.shape_cast %107 : vector<1x128x256xbf16> to vector<128x256xbf16>
    %cst_36 = arith.constant dense<0.000000e+00> : vector<16x256xf32>
    %109 = tpu.matmul %106, %108, %cst_36 {dimension_numbers = #tpu.dot_dimension_numbers<[1], [0], [0], [1], [0, 0, 1, 1], [], []>} : vector<16x128xbf16>, vector<128x256xbf16>, vector<16x256xf32> -> vector<16x256xf32>
    %c0_37 = arith.constant 0 : index
    %c0_38 = arith.constant 0 : index
    %c0_39 = arith.constant 0 : index
    %110 = vector.load %arg13[%c0_37, %c0_38, %c0_39] : memref<1x1x256xf32, #tpu.memory_space<vmem>>, vector<1x1x256xf32>
    %111 = vector.shape_cast %110 : vector<1x1x256xf32> to vector<1x256xf32>
    %112 = vector.broadcast %111 : vector<1x256xf32> to vector<16x256xf32>
    %113 = arith.addf %109, %112 : vector<16x256xf32>
    %114 = arith.mulf %113, %113 : vector<16x256xf32>
    %115 = arith.mulf %113, %114 : vector<16x256xf32>
    %cst_40 = arith.constant 4.471500e-02 : f32
    %116 = vector.broadcast %cst_40 : f32 to vector<16x256xf32>
    %117 = arith.mulf %116, %115 : vector<16x256xf32>
    %118 = arith.addf %113, %117 : vector<16x256xf32>
    %cst_41 = arith.constant 0.797884583 : f32
    %119 = vector.broadcast %cst_41 : f32 to vector<16x256xf32>
    %120 = arith.mulf %119, %118 : vector<16x256xf32>
    %121 = math.tanh %120 : vector<16x256xf32>
    %cst_42 = arith.constant 1.000000e+00 : f32
    %122 = vector.broadcast %cst_42 : f32 to vector<16x256xf32>
    %123 = arith.addf %122, %121 : vector<16x256xf32>
    %cst_43 = arith.constant 5.000000e-01 : f32
    %124 = vector.broadcast %cst_43 : f32 to vector<16x256xf32>
    %125 = arith.mulf %124, %123 : vector<16x256xf32>
    %126 = arith.mulf %113, %125 : vector<16x256xf32>
    %127 = arith.truncf %126 : vector<16x256xf32> to vector<16x256xbf16>
    %c0_44 = arith.constant 0 : index
    %c0_45 = arith.constant 0 : index
    %c0_46 = arith.constant 0 : index
    %128 = vector.load %arg14[%c0_44, %c0_45, %c0_46] : memref<1x256x128xbf16, #tpu.memory_space<vmem>>, vector<1x256x128xbf16>
    %129 = vector.shape_cast %128 : vector<1x256x128xbf16> to vector<256x128xbf16>
    %cst_47 = arith.constant dense<0.000000e+00> : vector<16x128xf32>
    %130 = tpu.matmul %127, %129, %cst_47 {dimension_numbers = #tpu.dot_dimension_numbers<[1], [0], [0], [1], [0, 0, 1, 1], [], []>} : vector<16x256xbf16>, vector<256x128xbf16>, vector<16x128xf32> -> vector<16x128xf32>
    %c0_48 = arith.constant 0 : index
    %c0_49 = arith.constant 0 : index
    %c0_50 = arith.constant 0 : index
    %131 = vector.load %arg15[%c0_48, %c0_49, %c0_50] : memref<1x1x128xf32, #tpu.memory_space<vmem>>, vector<1x1x128xf32>
    %132 = vector.shape_cast %131 : vector<1x1x128xf32> to vector<1x128xf32>
    %133 = vector.broadcast %132 : vector<1x128xf32> to vector<16x128xf32>
    %134 = arith.addf %130, %133 : vector<16x128xf32>
    %135 = arith.addf %134, %105 : vector<16x128xf32>
    %c0_51 = arith.constant 0 : index
    %c0_52 = arith.constant 0 : index
    %c0_53 = arith.constant 0 : index
    %136 = vector.load %arg16[%c0_51, %c0_52, %c0_53] : memref<1x1x128xf32, #tpu.memory_space<vmem>>, vector<1x1x128xf32>
    %137 = vector.shape_cast %136 : vector<1x1x128xf32> to vector<1x128xf32>
    %c0_54 = arith.constant 0 : index
    %c0_55 = arith.constant 0 : index
    %c0_56 = arith.constant 0 : index
    %138 = vector.load %arg17[%c0_54, %c0_55, %c0_56] : memref<1x1x128xf32, #tpu.memory_space<vmem>>, vector<1x1x128xf32>
    %139 = vector.shape_cast %138 : vector<1x1x128xf32> to vector<1x128xf32>
    %cst_57 = arith.constant dense<0.000000e+00> : vector<16xf32>
    %140 = vector.multi_reduction <add>, %135, %cst_57 [1] : vector<16x128xf32> to vector<16xf32>
    %141 = vector.shape_cast %140 : vector<16xf32> to vector<16x1xf32>
    %cst_58 = arith.constant 1.280000e+02 : f32
    %142 = vector.broadcast %cst_58 : f32 to vector<16x1xf32>
    %143 = arith.divf %141, %142 : vector<16x1xf32>
    %144 = vector.broadcast %143 : vector<16x1xf32> to vector<16x128xf32>
    %145 = arith.subf %135, %144 : vector<16x128xf32>
    %146 = arith.mulf %145, %145 : vector<16x128xf32>
    %cst_59 = arith.constant dense<0.000000e+00> : vector<16xf32>
    %147 = vector.multi_reduction <add>, %146, %cst_59 [1] : vector<16x128xf32> to vector<16xf32>
    %148 = vector.shape_cast %147 : vector<16xf32> to vector<16x1xf32>
    %cst_60 = arith.constant 1.280000e+02 : f32
    %149 = vector.broadcast %cst_60 : f32 to vector<16x1xf32>
    %150 = arith.divf %148, %149 : vector<16x1xf32>
    %151 = vector.broadcast %143 : vector<16x1xf32> to vector<16x128xf32>
    %152 = arith.subf %135, %151 : vector<16x128xf32>
    %cst_61 = arith.constant 9.99999996E-13 : f32
    %153 = vector.broadcast %cst_61 : f32 to vector<16x1xf32>
    %154 = arith.addf %150, %153 : vector<16x1xf32>
    %155 = math.rsqrt %154 : vector<16x1xf32>
    %156 = vector.broadcast %155 : vector<16x1xf32> to vector<16x128xf32>
    %157 = arith.mulf %152, %156 : vector<16x128xf32>
    %158 = vector.broadcast %137 : vector<1x128xf32> to vector<16x128xf32>
    %159 = arith.mulf %157, %158 : vector<16x128xf32>
    %160 = vector.broadcast %139 : vector<1x128xf32> to vector<16x128xf32>
    %161 = arith.addf %159, %160 : vector<16x128xf32>
    %c0_62 = arith.constant 0 : index
    %c0_63 = arith.constant 0 : index
    %162 = vector.load %arg19[%c0_62, %c0_63] : memref<16x128xf32, #tpu.memory_space<vmem>>, vector<16x128xf32>
    tpu.vector_store %arg19[%c0_62, %c0_63], %161 {strides = array<i32>} : memref<16x128xf32, #tpu.memory_space<vmem>>, vector<16x128xf32>,
    %c1_i32 = arith.constant 1 : i32
    %163 = arith.cmpi eq, %arg0, %c1_i32 : i32
    %164 = arith.extui %163 : i1 to i32
    %c0_i32_64 = arith.constant 0 : i32
    %165 = arith.cmpi ne, %164, %c0_i32_64 : i32
    scf.if %165 {
      %c0_65 = arith.constant 0 : index
      %c0_66 = arith.constant 0 : index
      %166 = vector.load %arg3[%c0_65, %c0_66] : memref<16x1xf32, #tpu.memory_space<vmem>>, vector<16x1xf32>
      %167 = vector.broadcast %166 : vector<16x1xf32> to vector<16x128xf32>
      %168 = arith.mulf %161, %167 : vector<16x128xf32>
      %169 = vector.shape_cast %168 : vector<16x128xf32> to vector<2x8x128xf32>
      %cst_67 = arith.constant dense<0.000000e+00> : vector<2x128xf32>
      %170 = vector.multi_reduction <add>, %169, %cst_67 [1] : vector<2x8x128xf32> to vector<2x128xf32>
      %c0_68 = arith.constant 0 : index
      %c0_69 = arith.constant 0 : index
      %171 = vector.load %arg18[%c0_68, %c0_69] : memref<2x128xf32, #tpu.memory_space<vmem>>, vector<2x128xf32>
      tpu.vector_store %arg18[%c0_68, %c0_69], %170 {strides = array<i32>} : memref<2x128xf32, #tpu.memory_space<vmem>>, vector<2x128xf32>,
    } else {
    }
    return
  }
  func.func @transform_0(%arg0: i32) -> (i32, i32) {
    %c0_i32 = arith.constant 0 : i32
    %c0_i32_0 = arith.constant 0 : i32
    %c0_i32_1 = arith.constant 0 : i32
    return %c0_i32, %c0_i32_0 : i32, i32
  }
  func.func @transform_1(%arg0: i32) -> (i32, i32) {
    %c0_i32 = arith.constant 0 : i32
    %c0_i32_0 = arith.constant 0 : i32
    %c0_i32_1 = arith.constant 0 : i32
    return %c0_i32, %c0_i32_0 : i32, i32
  }
  func.func @transform_2(%arg0: i32) -> (i32, i32) {
    %c0_i32 = arith.constant 0 : i32
    %c0_i32_0 = arith.constant 0 : i32
    %c0_i32_1 = arith.constant 0 : i32
    return %c0_i32, %c0_i32_0 : i32, i32
  }
  func.func @transform_3(%arg0: i32) -> (i32, i32) {
    %c0_i32 = arith.constant 0 : i32
    %c0_i32_0 = arith.constant 0 : i32
    %c0_i32_1 = arith.constant 0 : i32
    return %c0_i32, %c0_i32_0 : i32, i32
  }
  func.func @transform_4(%arg0: i32) -> (i32, i32) {
    %c0_i32 = arith.constant 0 : i32
    %c0_i32_0 = arith.constant 0 : i32
    %c0_i32_1 = arith.constant 0 : i32
    return %c0_i32, %c0_i32_0 : i32, i32
  }
  func.func @transform_5(%arg0: i32) -> (i32, i32, i32) {
    %c0_i32 = arith.constant 0 : i32
    %c0_i32_0 = arith.constant 0 : i32
    %c0_i32_1 = arith.constant 0 : i32
    return %arg0, %c0_i32, %c0_i32_0 : i32, i32, i32
  }
  func.func @transform_6(%arg0: i32) -> (i32, i32, i32) {
    %c0_i32 = arith.constant 0 : i32
    %c0_i32_0 = arith.constant 0 : i32
    %c0_i32_1 = arith.constant 0 : i32
    return %arg0, %c0_i32, %c0_i32_0 : i32, i32, i32
  }
  func.func @transform_7(%arg0: i32) -> (i32, i32, i32, i32) {
    %c0_i32 = arith.constant 0 : i32
    %c0_i32_0 = arith.constant 0 : i32
    %c0_i32_1 = arith.constant 0 : i32
    %c0_i32_2 = arith.constant 0 : i32
    return %arg0, %c0_i32, %c0_i32_0, %c0_i32_1 : i32, i32, i32, i32
  }
  func.func @transform_8(%arg0: i32) -> (i32, i32, i32) {
    %c0_i32 = arith.constant 0 : i32
    %c0_i32_0 = arith.constant 0 : i32
    %c0_i32_1 = arith.constant 0 : i32
    return %arg0, %c0_i32, %c0_i32_0 : i32, i32, i32
  }
  func.func @transform_9(%arg0: i32) -> (i32, i32, i32) {
    %c0_i32 = arith.constant 0 : i32
    %c0_i32_0 = arith.constant 0 : i32
    %c0_i32_1 = arith.constant 0 : i32
    return %arg0, %c0_i32, %c0_i32_0 : i32, i32, i32
  }
  func.func @transform_10(%arg0: i32) -> (i32, i32, i32) {
    %c0_i32 = arith.constant 0 : i32
    %c0_i32_0 = arith.constant 0 : i32
    %c0_i32_1 = arith.constant 0 : i32
    return %arg0, %c0_i32, %c0_i32_0 : i32, i32, i32
  }
  func.func @transform_11(%arg0: i32) -> (i32, i32, i32) {
    %c0_i32 = arith.constant 0 : i32
    %c0_i32_0 = arith.constant 0 : i32
    %c0_i32_1 = arith.constant 0 : i32
    return %arg0, %c0_i32, %c0_i32_0 : i32, i32, i32
  }
  func.func @transform_12(%arg0: i32) -> (i32, i32, i32) {
    %c0_i32 = arith.constant 0 : i32
    %c0_i32_0 = arith.constant 0 : i32
    %c0_i32_1 = arith.constant 0 : i32
    return %arg0, %c0_i32, %c0_i32_0 : i32, i32, i32
  }
  func.func @transform_13(%arg0: i32) -> (i32, i32, i32) {
    %c0_i32 = arith.constant 0 : i32
    %c0_i32_0 = arith.constant 0 : i32
    %c0_i32_1 = arith.constant 0 : i32
    return %arg0, %c0_i32, %c0_i32_0 : i32, i32, i32
  }
  func.func @transform_14(%arg0: i32) -> (i32, i32, i32) {
    %c0_i32 = arith.constant 0 : i32
    %c0_i32_0 = arith.constant 0 : i32
    %c0_i32_1 = arith.constant 0 : i32
    return %arg0, %c0_i32, %c0_i32_0 : i32, i32, i32
  }
  func.func @transform_15(%arg0: i32) -> (i32, i32, i32) {
    %c0_i32 = arith.constant 0 : i32
    %c0_i32_0 = arith.constant 0 : i32
    %c0_i32_1 = arith.constant 0 : i32
    return %arg0, %c0_i32, %c0_i32_0 : i32, i32, i32
  }
  func.func @transform_16(%arg0: i32) -> (i32, i32, i32) {
    %c0_i32 = arith.constant 0 : i32
    %c0_i32_0 = arith.constant 0 : i32
    %c0_i32_1 = arith.constant 0 : i32
    return %arg0, %c0_i32, %c0_i32_0 : i32, i32, i32
  }
  func.func @transform_17(%arg0: i32) -> (i32, i32) {
    %c0_i32 = arith.constant 0 : i32
    %c0_i32_0 = arith.constant 0 : i32
    %c0_i32_1 = arith.constant 0 : i32
    return %c0_i32, %c0_i32_0 : i32, i32
  }
}

</mosaic_0001>

<llo_original>
// kernel: forward.1
$region0: #{forward.1}
  #allocation0 [shape = 'u32[]', space=smem, size = 0x4, offset = 0x4, fixed_abs, tag = 'smem constant byte address 0x4 - core index']
  #allocation1 [shape = 'u32[72,128]{1,0:T(1,128)}', space=vmem, size = 0x9000, scoped, tag = 'internal scratch']
  #allocation2 [shape = 'f32[16,128]{1,0:T(8,128)}', space=vmem, size = 0x2000, scoped, tag = 'scratch operand']
  %s0 = inlined_call_operand.vmem [shape: f32[16,128], index: 0, kind: input, shape index: {}]
  %s1 = inlined_call_operand.vmem [shape: f32[16,16], index: 1, kind: input, shape index: {}]
  %s2 = inlined_call_operand.vmem [shape: f32[16,1], index: 2, kind: input, shape index: {}]
  %s3 = inlined_call_operand.vmem [shape: f32[1,128], index: 3, kind: input, shape index: {}]
  %s4 = inlined_call_operand.vmem [shape: f32[1,128], index: 4, kind: input, shape index: {}]
  %s5 = inlined_call_operand.hbm [shape: bf16[2,128,384], index: 5, kind: input, shape index: {}]
  %s6 = inlined_call_operand.vmem [shape: f32[2,1,384], index: 6, kind: input, shape index: {}]
  %s7 = inlined_call_operand.vmem [shape: bf16[2,4,32,128], index: 7, kind: input, shape index: {}]
  %s8 = inlined_call_operand.vmem [shape: f32[2,1,128], index: 8, kind: input, shape index: {}]
  %s9 = inlined_call_operand.vmem [shape: f32[2,1,128], index: 9, kind: input, shape index: {}]
  %s10 = inlined_call_operand.vmem [shape: f32[2,1,128], index: 10, kind: input, shape index: {}]
  %s11 = inlined_call_operand.vmem [shape: bf16[2,128,256], index: 11, kind: input, shape index: {}]
  %s12 = inlined_call_operand.vmem [shape: f32[2,1,256], index: 12, kind: input, shape index: {}]
  %s13 = inlined_call_operand.hbm [shape: bf16[2,256,128], index: 13, kind: input, shape index: {}]
  %s14 = inlined_call_operand.vmem [shape: f32[2,1,128], index: 14, kind: input, shape index: {}]
  %s15 = inlined_call_operand.vmem [shape: f32[2,1,128], index: 15, kind: input, shape index: {}]
  %s16 = inlined_call_operand.vmem [shape: f32[2,1,128], index: 16, kind: input, shape index: {}]
  %s17 = inlined_call_operand.hbm [shape: f32[2,128], index: 17, kind: output, shape index: {}]
  %s18 = sld [smem:[#allocation0]]
  $region117: #{forward.1} parent=0
    _
  %s20 = ssub.s32 1, %s18
  %s21 = scalar_select 0, %s20, %s18
  $region1: #{forward.1} parent=0
    #allocation3 [shape = 'u8[196608]{0}', space=vmem, size = 0x30000, scoped, tag = 'input window, operand 5']
    #allocation4 [shape = 's32[2]{0}', space=sflag, size = 0x8, scoped, tag = 'scoped memory for forward.1']
    #allocation5 [shape = 's32[2]{0}', space=sflag, size = 0x8, scoped, tag = 'scoped memory for forward.1']
    #allocation6 [shape = 'u8[131072]{0}', space=vmem, size = 0x20000, scoped, tag = 'input window, operand 13']
    #allocation7 [shape = 's32[2]{0}', space=sflag, size = 0x8, scoped, tag = 'scoped memory for forward.1']
    #allocation8 [shape = 'u8[1024]{0}', space=vmem, size = 0x400, scoped, tag = 'output window, operand 0, single buffered']
    %22 = vsyncpa [#allocation4], 0
    %s23 = scalar_lea.sflag [#allocation4], 1
    %24 = vsyncpa %s23, 0
    %25 = vsyncpa [#allocation7], 0
    %s26 = scalar_lea.sflag [#allocation7], 1
    %27 = vsyncpa %s26, 0
    %28 = vsyncpa [#allocation5], 0
    loop: start=0, step=1, limit=4
    $region2: #{forward.1} parent=1 // loop_pre_header
      _
    $region3: #{forward.1} parent=1 // loop_header
      %s30 = sphi 0, %s34
      %p31 = scmp.ge.s32.totalorder %s30, 4
      %s38 = sphi 0, %s38
      %s40 = sphi 0, %s38
      %s41 = sphi 0, %s40
      %s55 = sphi 0, %s41
      %s59 = sphi 0, %s59
      %s61 = sphi 0, %s59
      %s62 = sphi 0, %s61
      %s76 = sphi 0, %s62
      %s80 = sphi 0, %s80
      %s82 = sphi 0, %s80
      %s83 = sphi 0, %s82
      %s97 = sphi 0, %s83
      %s101 = sphi 0, %s101
      %s103 = sphi 0, %s101
      %s104 = sphi 0, %s103
      %s118 = sphi 0, %s104
      %s122 = sphi 0, %s122
      %s124 = sphi 0, %s122
      %s125 = sphi 0, %s124
      %s139 = sphi 0, %s125
      %s145 = sphi 0, %s147
      %s148 = sphi 0, %s145
      %s149 = sphi 0, %s148
      %s165 = sphi 0, %s149
      %s171 = sphi 0, %s173
      %s174 = sphi 0, %s171
      %s175 = sphi 0, %s174
      %s191 = sphi 0, %s175
      %s197 = sphi 0, %s199
      %s200 = sphi 0, %s197
      %s201 = sphi 0, %s200
      %s217 = sphi 0, %s201
      %s223 = sphi 0, %s225
      %s226 = sphi 0, %s223
      %s227 = sphi 0, %s226
      %s243 = sphi 0, %s227
      %s249 = sphi 0, %s251
      %s252 = sphi 0, %s249
      %s253 = sphi 0, %s252
      %s269 = sphi 0, %s253
      %s275 = sphi 0, %s277
      %s278 = sphi 0, %s275
      %s279 = sphi 0, %s278
      %s295 = sphi 0, %s279
      %s301 = sphi 0, %s303
      %s304 = sphi 0, %s301
      %s305 = sphi 0, %s304
      %s321 = sphi 0, %s305
      %s327 = sphi 0, %s329
      %s330 = sphi 0, %s327
      %s331 = sphi 0, %s330
      %s347 = sphi 0, %s331
      %s353 = sphi 0, %s355
      %s356 = sphi 0, %s353
      %s357 = sphi 0, %s356
      %s373 = sphi 0, %s357
      %s379 = sphi 0, %s381
      %s382 = sphi 0, %s379
      %s383 = sphi 0, %s382
      %s399 = sphi 0, %s383
      %s405 = sphi 0, %s407
      %s408 = sphi 0, %s405
      %s409 = sphi 0, %s408
      %s425 = sphi 0, %s409
      %s431 = sphi 0, %s433
      %s434 = sphi 0, %s431
      %s435 = sphi 0, %s434
      %s451 = sphi 0, %s435
      %s455 = sphi 0, %s455
      %s457 = sphi 0, %s455
      %s458 = sphi 0, %s457
      %s472 = sphi 0, %s458
    $region4: #{forward.1} parent=1 // loop_header_branch
      %33 = sbr.rel (%p31) target = $region8
    $region5: #{forward.1} parent=1 // loop_body
      %s35 = ssub.s32 %s30, 1
      %s36 = ssub.s32 %s30, 2
      %s37 = sadd.s32 %s30, 1
      %s39 = sadd.s32 %s38, 1
      %p42 = scmp.eq.s32.totalorder %s30, 1
      %p43 = scmp.ne.s32.totalorder %s38, %s40
      %p44 = scmp.eq.s32.totalorder %s30, 0
      %p45 = por %p43, %p44
      %p46 = scmp.ne.s32.totalorder %s38, %s40
      %p47 = scmp.eq.s32.totalorder %s35, 1
      %p48 = por %p46, %p47
      %p49 = scmp.ne.s32.totalorder %s40, %s41
      %p50 = scmp.eq.s32.totalorder %s35, 0
      %p51 = por %p49, %p50
      %p52 = scmp.ne.s32.totalorder %s40, %s41
      %p53 = scmp.eq.s32.totalorder %s36, 1
      %p54 = por %p52, %p53
      %p56 = scmp.ne.s32.totalorder %s41, %s55
      %p57 = scmp.eq.s32.totalorder %s36, 0
      %p58 = por %p56, %p57
      %s60 = sadd.s32 %s59, 1
      %p63 = scmp.eq.s32.totalorder %s30, 1
      %p64 = scmp.ne.s32.totalorder %s59, %s61
      %p65 = scmp.eq.s32.totalorder %s30, 0
      %p66 = por %p64, %p65
      %p67 = scmp.ne.s32.totalorder %s59, %s61
      %p68 = scmp.eq.s32.totalorder %s35, 1
      %p69 = por %p67, %p68
      %p70 = scmp.ne.s32.totalorder %s61, %s62
      %p71 = scmp.eq.s32.totalorder %s35, 0
      %p72 = por %p70, %p71
      %p73 = scmp.ne.s32.totalorder %s61, %s62
      %p74 = scmp.eq.s32.totalorder %s36, 1
      %p75 = por %p73, %p74
      %p77 = scmp.ne.s32.totalorder %s62, %s76
      %p78 = scmp.eq.s32.totalorder %s36, 0
      %p79 = por %p77, %p78
      %s81 = sadd.s32 %s80, 1
      %p84 = scmp.eq.s32.totalorder %s30, 1
      %p85 = scmp.ne.s32.totalorder %s80, %s82
      %p86 = scmp.eq.s32.totalorder %s30, 0
      %p87 = por %p85, %p86
      %p88 = scmp.ne.s32.totalorder %s80, %s82
      %p89 = scmp.eq.s32.totalorder %s35, 1
      %p90 = por %p88, %p89
      %p91 = scmp.ne.s32.totalorder %s82, %s83
      %p92 = scmp.eq.s32.totalorder %s35, 0
      %p93 = por %p91, %p92
      %p94 = scmp.ne.s32.totalorder %s82, %s83
      %p95 = scmp.eq.s32.totalorder %s36, 1
      %p96 = por %p94, %p95
      %p98 = scmp.ne.s32.totalorder %s83, %s97
      %p99 = scmp.eq.s32.totalorder %s36, 0
      %p100 = por %p98, %p99
      %s102 = sadd.s32 %s101, 1
      %p105 = scmp.eq.s32.totalorder %s30, 1
      %p106 = scmp.ne.s32.totalorder %s101, %s103
      %p107 = scmp.eq.s32.totalorder %s30, 0
      %p108 = por %p106, %p107
      %p109 = scmp.ne.s32.totalorder %s101, %s103
      %p110 = scmp.eq.s32.totalorder %s35, 1
      %p111 = por %p109, %p110
      %p112 = scmp.ne.s32.totalorder %s103, %s104
      %p113 = scmp.eq.s32.totalorder %s35, 0
      %p114 = por %p112, %p113
      %p115 = scmp.ne.s32.totalorder %s103, %s104
      %p116 = scmp.eq.s32.totalorder %s36, 1
      %p117 = por %p115, %p116
      %p119 = scmp.ne.s32.totalorder %s104, %s118
      %p120 = scmp.eq.s32.totalorder %s36, 0
      %p121 = por %p119, %p120
      %s123 = sadd.s32 %s122, 1
      %p126 = scmp.eq.s32.totalorder %s30, 1
      %p127 = scmp.ne.s32.totalorder %s122, %s124
      %p128 = scmp.eq.s32.totalorder %s30, 0
      %p129 = por %p127, %p128
      %p130 = scmp.ne.s32.totalorder %s122, %s124
      %p131 = scmp.eq.s32.totalorder %s35, 1
      %p132 = por %p130, %p131
      %p133 = scmp.ne.s32.totalorder %s124, %s125
      %p134 = scmp.eq.s32.totalorder %s35, 0
      %p135 = por %p133, %p134
      %p136 = scmp.ne.s32.totalorder %s124, %s125
      %p137 = scmp.eq.s32.totalorder %s36, 1
      %p138 = por %p136, %p137
      %p140 = scmp.ne.s32.totalorder %s125, %s139
      %p141 = scmp.eq.s32.totalorder %s36, 0
      %p142 = por %p140, %p141
      %s143 = ssub.s32 %s30, %s37
      %p144 = scmp.eq.s32.totalorder %s143, 0
      %s146 = sadd.s32 %s145, 1
      %s147 = scalar_select %p144, %s145, %s146
      %p150 = pneg %p144
      %p151 = scmp.eq.s32.totalorder %s30, 1
      %p152 = por %p150, %p151
      %p153 = scmp.ne.s32.totalorder %s145, %s148
      %p154 = scmp.eq.s32.totalorder %s30, 0
      %p155 = por %p153, %p154
      %p156 = scmp.ne.s32.totalorder %s145, %s148
      %p157 = scmp.eq.s32.totalorder %s35, 1
      %p158 = por %p156, %p157
      %p159 = scmp.ne.s32.totalorder %s148, %s149
      %p160 = scmp.eq.s32.totalorder %s35, 0
      %p161 = por %p159, %p160
      %p162 = scmp.ne.s32.totalorder %s148, %s149
      %p163 = scmp.eq.s32.totalorder %s36, 1
      %p164 = por %p162, %p163
      %p166 = scmp.ne.s32.totalorder %s149, %s165
      %p167 = scmp.eq.s32.totalorder %s36, 0
      %p168 = por %p166, %p167
      %s169 = ssub.s32 %s30, %s37
      %p170 = scmp.eq.s32.totalorder %s169, 0
      %s172 = sadd.s32 %s171, 1
      %s173 = scalar_select %p170, %s171, %s172
      %p176 = pneg %p170
      %p177 = scmp.eq.s32.totalorder %s30, 1
      %p178 = por %p176, %p177
      %p179 = scmp.ne.s32.totalorder %s171, %s174
      %p180 = scmp.eq.s32.totalorder %s30, 0
      %p181 = por %p179, %p180
      %p182 = scmp.ne.s32.totalorder %s171, %s174
      %p183 = scmp.eq.s32.totalorder %s35, 1
      %p184 = por %p182, %p183
      %p185 = scmp.ne.s32.totalorder %s174, %s175
      %p186 = scmp.eq.s32.totalorder %s35, 0
      %p187 = por %p185, %p186
      %p188 = scmp.ne.s32.totalorder %s174, %s175
      %p189 = scmp.eq.s32.totalorder %s36, 1
      %p190 = por %p188, %p189
      %p192 = scmp.ne.s32.totalorder %s175, %s191
      %p193 = scmp.eq.s32.totalorder %s36, 0
      %p194 = por %p192, %p193
      %s195 = ssub.s32 %s30, %s37
      %p196 = scmp.eq.s32.totalorder %s195, 0
      %s198 = sadd.s32 %s197, 1
      %s199 = scalar_select %p196, %s197, %s198
      %p202 = pneg %p196
      %p203 = scmp.eq.s32.totalorder %s30, 1
      %p204 = por %p202, %p203
      %p205 = scmp.ne.s32.totalorder %s197, %s200
      %p206 = scmp.eq.s32.totalorder %s30, 0
      %p207 = por %p205, %p206
      %p208 = scmp.ne.s32.totalorder %s197, %s200
      %p209 = scmp.eq.s32.totalorder %s35, 1
      %p210 = por %p208, %p209
      %p211 = scmp.ne.s32.totalorder %s200, %s201
      %p212 = scmp.eq.s32.totalorder %s35, 0
      %p213 = por %p211, %p212
      %p214 = scmp.ne.s32.totalorder %s200, %s201
      %p215 = scmp.eq.s32.totalorder %s36, 1
      %p216 = por %p214, %p215
      %p218 = scmp.ne.s32.totalorder %s201, %s217
      %p219 = scmp.eq.s32.totalorder %s36, 0
      %p220 = por %p218, %p219
      %s221 = ssub.s32 %s30, %s37
      %p222 = scmp.eq.s32.totalorder %s221, 0
      %s224 = sadd.s32 %s223, 1
      %s225 = scalar_select %p222, %s223, %s224
      %p228 = pneg %p222
      %p229 = scmp.eq.s32.totalorder %s30, 1
      %p230 = por %p228, %p229
      %p231 = scmp.ne.s32.totalorder %s223, %s226
      %p232 = scmp.eq.s32.totalorder %s30, 0
      %p233 = por %p231, %p232
      %p234 = scmp.ne.s32.totalorder %s223, %s226
      %p235 = scmp.eq.s32.totalorder %s35, 1
      %p236 = por %p234, %p235
      %p237 = scmp.ne.s32.totalorder %s226, %s227
      %p238 = scmp.eq.s32.totalorder %s35, 0
      %p239 = por %p237, %p238
      %p240 = scmp.ne.s32.totalorder %s226, %s227
      %p241 = scmp.eq.s32.totalorder %s36, 1
      %p242 = por %p240, %p241
      %p244 = scmp.ne.s32.totalorder %s227, %s243
      %p245 = scmp.eq.s32.totalorder %s36, 0
      %p246 = por %p244, %p245
      %s247 = ssub.s32 %s30, %s37
      %p248 = scmp.eq.s32.totalorder %s247, 0
      %s250 = sadd.s32 %s249, 1
      %s251 = scalar_select %p248, %s249, %s250
      %p254 = pneg %p248
      %p255 = scmp.eq.s32.totalorder %s30, 1
      %p256 = por %p254, %p255
      %p257 = scmp.ne.s32.totalorder %s249, %s252
      %p258 = scmp.eq.s32.totalorder %s30, 0
      %p259 = por %p257, %p258
      %p260 = scmp.ne.s32.totalorder %s249, %s252
      %p261 = scmp.eq.s32.totalorder %s35, 1
      %p262 = por %p260, %p261
      %p263 = scmp.ne.s32.totalorder %s252, %s253
      %p264 = scmp.eq.s32.totalorder %s35, 0
      %p265 = por %p263, %p264
      %p266 = scmp.ne.s32.totalorder %s252, %s253
      %p267 = scmp.eq.s32.totalorder %s36, 1
      %p268 = por %p266, %p267
      %p270 = scmp.ne.s32.totalorder %s253, %s269
      %p271 = scmp.eq.s32.totalorder %s36, 0
      %p272 = por %p270, %p271
      %s273 = ssub.s32 %s30, %s37
      %p274 = scmp.eq.s32.totalorder %s273, 0
      %s276 = sadd.s32 %s275, 1
      %s277 = scalar_select %p274, %s275, %s276
      %p280 = pneg %p274
      %p281 = scmp.eq.s32.totalorder %s30, 1
      %p282 = por %p280, %p281
      %p283 = scmp.ne.s32.totalorder %s275, %s278
      %p284 = scmp.eq.s32.totalorder %s30, 0
      %p285 = por %p283, %p284
      %p286 = scmp.ne.s32.totalorder %s275, %s278
      %p287 = scmp.eq.s32.totalorder %s35, 1
      %p288 = por %p286, %p287
      %p289 = scmp.ne.s32.totalorder %s278, %s279
      %p290 = scmp.eq.s32.totalorder %s35, 0
      %p291 = por %p289, %p290
      %p292 = scmp.ne.s32.totalorder %s278, %s279
      %p293 = scmp.eq.s32.totalorder %s36, 1
      %p294 = por %p292, %p293
      %p296 = scmp.ne.s32.totalorder %s279, %s295
      %p297 = scmp.eq.s32.totalorder %s36, 0
      %p298 = por %p296, %p297
      %s299 = ssub.s32 %s30, %s37
      %p300 = scmp.eq.s32.totalorder %s299, 0
      %s302 = sadd.s32 %s301, 1
      %s303 = scalar_select %p300, %s301, %s302
      %p306 = pneg %p300
      %p307 = scmp.eq.s32.totalorder %s30, 1
      %p308 = por %p306, %p307
      %p309 = scmp.ne.s32.totalorder %s301, %s304
      %p310 = scmp.eq.s32.totalorder %s30, 0
      %p311 = por %p309, %p310
      %p312 = scmp.ne.s32.totalorder %s301, %s304
      %p313 = scmp.eq.s32.totalorder %s35, 1
      %p314 = por %p312, %p313
      %p315 = scmp.ne.s32.totalorder %s304, %s305
      %p316 = scmp.eq.s32.totalorder %s35, 0
      %p317 = por %p315, %p316
      %p318 = scmp.ne.s32.totalorder %s304, %s305
      %p319 = scmp.eq.s32.totalorder %s36, 1
      %p320 = por %p318, %p319
      %p322 = scmp.ne.s32.totalorder %s305, %s321
      %p323 = scmp.eq.s32.totalorder %s36, 0
      %p324 = por %p322, %p323
      %s325 = ssub.s32 %s30, %s37
      %p326 = scmp.eq.s32.totalorder %s325, 0
      %s328 = sadd.s32 %s327, 1
      %s329 = scalar_select %p326, %s327, %s328
      %p332 = pneg %p326
      %p333 = scmp.eq.s32.totalorder %s30, 1
      %p334 = por %p332, %p333
      %p335 = scmp.ne.s32.totalorder %s327, %s330
      %p336 = scmp.eq.s32.totalorder %s30, 0
      %p337 = por %p335, %p336
      %p338 = scmp.ne.s32.totalorder %s327, %s330
      %p339 = scmp.eq.s32.totalorder %s35, 1
      %p340 = por %p338, %p339
      %p341 = scmp.ne.s32.totalorder %s330, %s331
      %p342 = scmp.eq.s32.totalorder %s35, 0
      %p343 = por %p341, %p342
      %p344 = scmp.ne.s32.totalorder %s330, %s331
      %p345 = scmp.eq.s32.totalorder %s36, 1
      %p346 = por %p344, %p345
      %p348 = scmp.ne.s32.totalorder %s331, %s347
      %p349 = scmp.eq.s32.totalorder %s36, 0
      %p350 = por %p348, %p349
      %s351 = ssub.s32 %s30, %s37
      %p352 = scmp.eq.s32.totalorder %s351, 0
      %s354 = sadd.s32 %s353, 1
      %s355 = scalar_select %p352, %s353, %s354
      %p358 = pneg %p352
      %p359 = scmp.eq.s32.totalorder %s30, 1
      %p360 = por %p358, %p359
      %p361 = scmp.ne.s32.totalorder %s353, %s356
      %p362 = scmp.eq.s32.totalorder %s30, 0
      %p363 = por %p361, %p362
      %p364 = scmp.ne.s32.totalorder %s353, %s356
      %p365 = scmp.eq.s32.totalorder %s35, 1
      %p366 = por %p364, %p365
      %p367 = scmp.ne.s32.totalorder %s356, %s357
      %p368 = scmp.eq.s32.totalorder %s35, 0
      %p369 = por %p367, %p368
      %p370 = scmp.ne.s32.totalorder %s356, %s357
      %p371 = scmp.eq.s32.totalorder %s36, 1
      %p372 = por %p370, %p371
      %p374 = scmp.ne.s32.totalorder %s357, %s373
      %p375 = scmp.eq.s32.totalorder %s36, 0
      %p376 = por %p374, %p375
      %s377 = ssub.s32 %s30, %s37
      %p378 = scmp.eq.s32.totalorder %s377, 0
      %s380 = sadd.s32 %s379, 1
      %s381 = scalar_select %p378, %s379, %s380
      %p384 = pneg %p378
      %p385 = scmp.eq.s32.totalorder %s30, 1
      %p386 = por %p384, %p385
      %p387 = scmp.ne.s32.totalorder %s379, %s382
      %p388 = scmp.eq.s32.totalorder %s30, 0
      %p389 = por %p387, %p388
      %p390 = scmp.ne.s32.totalorder %s379, %s382
      %p391 = scmp.eq.s32.totalorder %s35, 1
      %p392 = por %p390, %p391
      %p393 = scmp.ne.s32.totalorder %s382, %s383
      %p394 = scmp.eq.s32.totalorder %s35, 0
      %p395 = por %p393, %p394
      %p396 = scmp.ne.s32.totalorder %s382, %s383
      %p397 = scmp.eq.s32.totalorder %s36, 1
      %p398 = por %p396, %p397
      %p400 = scmp.ne.s32.totalorder %s383, %s399
      %p401 = scmp.eq.s32.totalorder %s36, 0
      %p402 = por %p400, %p401
      %s403 = ssub.s32 %s30, %s37
      %p404 = scmp.eq.s32.totalorder %s403, 0
      %s406 = sadd.s32 %s405, 1
      %s407 = scalar_select %p404, %s405, %s406
      %p410 = pneg %p404
      %p411 = scmp.eq.s32.totalorder %s30, 1
      %p412 = por %p410, %p411
      %p413 = scmp.ne.s32.totalorder %s405, %s408
      %p414 = scmp.eq.s32.totalorder %s30, 0
      %p415 = por %p413, %p414
      %p416 = scmp.ne.s32.totalorder %s405, %s408
      %p417 = scmp.eq.s32.totalorder %s35, 1
      %p418 = por %p416, %p417
      %p419 = scmp.ne.s32.totalorder %s408, %s409
      %p420 = scmp.eq.s32.totalorder %s35, 0
      %p421 = por %p419, %p420
      %p422 = scmp.ne.s32.totalorder %s408, %s409
      %p423 = scmp.eq.s32.totalorder %s36, 1
      %p424 = por %p422, %p423
      %p426 = scmp.ne.s32.totalorder %s409, %s425
      %p427 = scmp.eq.s32.totalorder %s36, 0
      %p428 = por %p426, %p427
      %s429 = ssub.s32 %s30, %s37
      %p430 = scmp.eq.s32.totalorder %s429, 0
      %s432 = sadd.s32 %s431, 1
      %s433 = scalar_select %p430, %s431, %s432
      %p436 = pneg %p430
      %p437 = scmp.eq.s32.totalorder %s30, 1
      %p438 = por %p436, %p437
      %p439 = scmp.ne.s32.totalorder %s431, %s434
      %p440 = scmp.eq.s32.totalorder %s30, 0
      %p441 = por %p439, %p440
      %p442 = scmp.ne.s32.totalorder %s431, %s434
      %p443 = scmp.eq.s32.totalorder %s35, 1
      %p444 = por %p442, %p443
      %p445 = scmp.ne.s32.totalorder %s434, %s435
      %p446 = scmp.eq.s32.totalorder %s35, 0
      %p447 = por %p445, %p446
      %p448 = scmp.ne.s32.totalorder %s434, %s435
      %p449 = scmp.eq.s32.totalorder %s36, 1
      %p450 = por %p448, %p449
      %p452 = scmp.ne.s32.totalorder %s435, %s451
      %p453 = scmp.eq.s32.totalorder %s36, 0
      %p454 = por %p452, %p453
      %s456 = sadd.s32 %s455, 1
      %p459 = scmp.eq.s32.totalorder %s30, 1
      %p460 = scmp.ne.s32.totalorder %s455, %s457
      %p461 = scmp.eq.s32.totalorder %s30, 0
      %p462 = por %p460, %p461
      %p463 = scmp.ne.s32.totalorder %s455, %s457
      %p464 = scmp.eq.s32.totalorder %s35, 1
      %p465 = por %p463, %p464
      %p466 = scmp.ne.s32.totalorder %s457, %s458
      %p467 = scmp.eq.s32.totalorder %s35, 0
      %p468 = por %p466, %p467
      %p469 = scmp.ne.s32.totalorder %s457, %s458
      %p470 = scmp.eq.s32.totalorder %s36, 1
      %p471 = por %p469, %p470
      %p473 = scmp.ne.s32.totalorder %s458, %s472
      %p474 = scmp.eq.s32.totalorder %s36, 0
      %p475 = por %p473, %p474
      %p476 = scmp.le.s32.totalorder 1, %s30
      %p477 = scmp.lt.s32.totalorder %s30, 3
      %p478 = pnand %p476, %p477
      %p479 = pneg %p478
      // Predicated region
      $region9: #{forward.1} parent=5 // pred_check
        _
      $region10: #{forward.1} parent=5 // pred_check_branch
        %481 = sbr.rel (%p478) target = $region12
      $region11: #{forward.1} parent=5 // pred_region
        %s482 = ssub.s32 %s30, 1
        // Predicated region
        $region13: #{forward.1} parent=11 // pred_check
          %p483 = pneg %p51
        $region14: #{forward.1} parent=11 // pred_check_branch
          %485 = sbr.rel (%p483) target = $region16
        $region15: #{forward.1} parent=11 // pred_region
          _
        $region16: #{forward.1} parent=11 // pred_fallthru
          _
        // Predicated region
        $region17: #{forward.1} parent=11 // pred_check
          %p486 = pneg %p72
        $region18: #{forward.1} parent=11 // pred_check_branch
          %488 = sbr.rel (%p486) target = $region20
        $region19: #{forward.1} parent=11 // pred_region
          _
        $region20: #{forward.1} parent=11 // pred_fallthru
          _
        // Predicated region
        $region21: #{forward.1} parent=11 // pred_check
          %p489 = pneg %p93
        $region22: #{forward.1} parent=11 // pred_check_branch
          %491 = sbr.rel (%p489) target = $region24
        $region23: #{forward.1} parent=11 // pred_region
          _
        $region24: #{forward.1} parent=11 // pred_fallthru
          _
        // Predicated region
        $region25: #{forward.1} parent=11 // pred_check
          %p492 = pneg %p114
        $region26: #{forward.1} parent=11 // pred_check_branch
          %494 = sbr.rel (%p492) target = $region28
        $region27: #{forward.1} parent=11 // pred_region
          _
        $region28: #{forward.1} parent=11 // pred_fallthru
          _
        // Predicated region
        $region29: #{forward.1} parent=11 // pred_check
          %p495 = pneg %p135
        $region30: #{forward.1} parent=11 // pred_check_branch
          %497 = sbr.rel (%p495) target = $region32
        $region31: #{forward.1} parent=11 // pred_region
          _
        $region32: #{forward.1} parent=11 // pred_fallthru
          _
      $region12: #{forward.1} parent=5 // pred_fallthru
        _
      %p498 = scmp.lt.s32.totalorder %s30, 2
      // Predicated region
      $region33: #{forward.1} parent=5 // pred_check
        %p499 = pneg %p498
      $region34: #{forward.1} parent=5 // pred_check_branch
        %501 = sbr.rel (%p499) target = $region36
      $region35: #{forward.1} parent=5 // pred_region
        // Predicated region
        $region37: #{forward.1} parent=35 // pred_check
          %p502 = pneg %p155
        $region38: #{forward.1} parent=35 // pred_check_branch
          %504 = sbr.rel (%p502) target = $region40
        $region39: #{forward.1} parent=35 // pred_region
          %s505 = sand.u32 %s145, 1
          %s506 = scalar_lea.sflag [#allocation4], %s505
          %s507 = sand.u32 %s145, 1
          %s508 = smul.addr %s507, 192
          %s509 = scalar_lea.vmem [#allocation3], %s508
          %511 = vsyncadd %s506, 0
          %s512 = smul.addr %s30, 48
          %s513 = smul.addr %s512, 4
          %s514 = scalar_lea.hbm %s5, %s513
          %s515 = sshll.u32 %s514, 4
          %s516 = int_to_ptr.hbm [resolvable:$true] %s515
          %s517 = sshll.u32 %s509, 4
          %s518 = int_to_ptr.vmem [resolvable:$true] %s517
          %523 = dma.hbm_to_vmem [thread:$0]  %s516, 3072, %s518, %s506, 192, 192, 12
        $region40: #{forward.1} parent=35 // pred_fallthru
          _
        // Predicated region
        $region41: #{forward.1} parent=35 // pred_check
          %p524 = pneg %p181
        $region42: #{forward.1} parent=35 // pred_check_branch
          %526 = sbr.rel (%p524) target = $region44
        $region43: #{forward.1} parent=35 // pred_region
          %p527 = scmp.lt.s32.totalorder %s30, 1
          %s528 = scalar_select %p527, %s30, 1
          %s529 = smul.addr %s528, 3
          %s530 = scalar_lea.vmem %s6, %s529
        $region44: #{forward.1} parent=35 // pred_fallthru
          _
        // Predicated region
        $region45: #{forward.1} parent=35 // pred_check
          %p531 = pneg %p207
        $region46: #{forward.1} parent=35 // pred_check_branch
          %533 = sbr.rel (%p531) target = $region48
        $region47: #{forward.1} parent=35 // pred_region
          %p534 = scmp.lt.s32.totalorder %s30, 1
          %s535 = scalar_select %p534, %s30, 1
          %s536 = smul.addr %s535, 16
          %s537 = smul.addr %s536, 4
          %s538 = scalar_lea.vmem %s7, %s537
        $region48: #{forward.1} parent=35 // pred_fallthru
          _
        // Predicated region
        $region49: #{forward.1} parent=35 // pred_check
          %p539 = pneg %p233
        $region50: #{forward.1} parent=35 // pred_check_branch
          %541 = sbr.rel (%p539) target = $region52
        $region51: #{forward.1} parent=35 // pred_region
          %p542 = scmp.lt.s32.totalorder %s30, 1
          %s543 = scalar_select %p542, %s30, 1
          %s544 = scalar_lea.vmem %s8, %s543
        $region52: #{forward.1} parent=35 // pred_fallthru
          _
        // Predicated region
        $region53: #{forward.1} parent=35 // pred_check
          %p545 = pneg %p259
        $region54: #{forward.1} parent=35 // pred_check_branch
          %547 = sbr.rel (%p545) target = $region56
        $region55: #{forward.1} parent=35 // pred_region
          %p548 = scmp.lt.s32.totalorder %s30, 1
          %s549 = scalar_select %p548, %s30, 1
          %s550 = scalar_lea.vmem %s9, %s549
        $region56: #{forward.1} parent=35 // pred_fallthru
          _
        // Predicated region
        $region57: #{forward.1} parent=35 // pred_check
          %p551 = pneg %p285
        $region58: #{forward.1} parent=35 // pred_check_branch
          %553 = sbr.rel (%p551) target = $region60
        $region59: #{forward.1} parent=35 // pred_region
          %p554 = scmp.lt.s32.totalorder %s30, 1
          %s555 = scalar_select %p554, %s30, 1
          %s556 = scalar_lea.vmem %s10, %s555
        $region60: #{forward.1} parent=35 // pred_fallthru
          _
        // Predicated region
        $region61: #{forward.1} parent=35 // pred_check
          %p557 = pneg %p311
        $region62: #{forward.1} parent=35 // pred_check_branch
          %559 = sbr.rel (%p557) target = $region64
        $region63: #{forward.1} parent=35 // pred_region
          %p560 = scmp.lt.s32.totalorder %s30, 1
          %s561 = scalar_select %p560, %s30, 1
          %s562 = smul.addr %s561, 32
          %s563 = smul.addr %s562, 4
          %s564 = scalar_lea.vmem %s11, %s563
        $region64: #{forward.1} parent=35 // pred_fallthru
          _
        // Predicated region
        $region65: #{forward.1} parent=35 // pred_check
          %p565 = pneg %p337
        $region66: #{forward.1} parent=35 // pred_check_branch
          %567 = sbr.rel (%p565) target = $region68
        $region67: #{forward.1} parent=35 // pred_region
          %p568 = scmp.lt.s32.totalorder %s30, 1
          %s569 = scalar_select %p568, %s30, 1
          %s570 = smul.addr %s569, 2
          %s571 = scalar_lea.vmem %s12, %s570
        $region68: #{forward.1} parent=35 // pred_fallthru
          _
        // Predicated region
        $region69: #{forward.1} parent=35 // pred_check
          %p572 = pneg %p363
        $region70: #{forward.1} parent=35 // pred_check_branch
          %574 = sbr.rel (%p572) target = $region72
        $region71: #{forward.1} parent=35 // pred_region
          %s575 = sand.u32 %s353, 1
          %s576 = scalar_lea.sflag [#allocation7], %s575
          %s577 = sand.u32 %s353, 1
          %s578 = smul.addr %s577, 128
          %s579 = scalar_lea.vmem [#allocation6], %s578
          %581 = vsyncadd %s576, 0
          %s582 = smul.addr %s30, 32
          %s583 = smul.addr %s582, 4
          %s584 = scalar_lea.hbm %s13, %s583
          %s585 = sshll.u32 %s584, 4
          %s586 = int_to_ptr.hbm [resolvable:$true] %s585
          %s587 = sshll.u32 %s579, 4
          %s588 = int_to_ptr.vmem [resolvable:$true] %s587
          %593 = dma.hbm_to_vmem [thread:$0]  %s586, 2048, %s588, %s576, 64, 64, 4
        $region72: #{forward.1} parent=35 // pred_fallthru
          _
        // Predicated region
        $region73: #{forward.1} parent=35 // pred_check
          %p594 = pneg %p389
        $region74: #{forward.1} parent=35 // pred_check_branch
          %596 = sbr.rel (%p594) target = $region76
        $region75: #{forward.1} parent=35 // pred_region
          %p597 = scmp.lt.s32.totalorder %s30, 1
          %s598 = scalar_select %p597, %s30, 1
          %s599 = scalar_lea.vmem %s14, %s598
        $region76: #{forward.1} parent=35 // pred_fallthru
          _
        // Predicated region
        $region77: #{forward.1} parent=35 // pred_check
          %p600 = pneg %p415
        $region78: #{forward.1} parent=35 // pred_check_branch
          %602 = sbr.rel (%p600) target = $region80
        $region79: #{forward.1} parent=35 // pred_region
          %p603 = scmp.lt.s32.totalorder %s30, 1
          %s604 = scalar_select %p603, %s30, 1
          %s605 = scalar_lea.vmem %s15, %s604
        $region80: #{forward.1} parent=35 // pred_fallthru
          _
        // Predicated region
        $region81: #{forward.1} parent=35 // pred_check
          %p606 = pneg %p441
        $region82: #{forward.1} parent=35 // pred_check_branch
          %608 = sbr.rel (%p606) target = $region84
        $region83: #{forward.1} parent=35 // pred_region
          %p609 = scmp.lt.s32.totalorder %s30, 1
          %s610 = scalar_select %p609, %s30, 1
          %s611 = scalar_lea.vmem %s16, %s610
        $region84: #{forward.1} parent=35 // pred_fallthru
          _
      $region36: #{forward.1} parent=5 // pred_fallthru
        _
      %p612 = scmp.le.s32.totalorder 1, %s30
      %p613 = scmp.lt.s32.totalorder %s30, 3
      %p614 = pnand %p612, %p613
      %p615 = pneg %p614
      // Predicated region
      $region85: #{forward.1} parent=5 // pred_check
        _
      $region86: #{forward.1} parent=5 // pred_check_branch
        %617 = sbr.rel (%p614) target = $region88
      $region87: #{forward.1} parent=5 // pred_region
        %s618 = ssub.s32 %s30, 1
        %s619 = sand.u32 %s148, 1
        %s620 = scalar_lea.sflag [#allocation4], %s619
        %s621 = sand.u32 %s148, 1
        %s622 = smul.addr %s621, 192
        %s623 = scalar_lea.vmem [#allocation3], %s622
        // Predicated region
        $region89: #{forward.1} parent=87 // pred_check
          %p624 = pneg %p161
        $region90: #{forward.1} parent=87 // pred_check_branch
          %626 = sbr.rel (%p624) target = $region92
        $region91: #{forward.1} parent=87 // pred_region
          %628 = dma.done %s620, 3072
        $region92: #{forward.1} parent=87 // pred_fallthru
          _
        %s629 = sand.u32 %s356, 1
        %s630 = scalar_lea.sflag [#allocation7], %s629
        %s631 = sand.u32 %s356, 1
        %s632 = smul.addr %s631, 128
        %s633 = scalar_lea.vmem [#allocation6], %s632
        // Predicated region
        $region93: #{forward.1} parent=87 // pred_check
          %p634 = pneg %p369
        $region94: #{forward.1} parent=87 // pred_check_branch
          %636 = sbr.rel (%p634) target = $region96
        $region95: #{forward.1} parent=87 // pred_region
          %638 = dma.done %s630, 2048
        $region96: #{forward.1} parent=87 // pred_fallthru
          _
        %p639 = pneg %p51
        %p640 = pneg %p48
        %p641 = pneg %p72
        %p642 = pneg %p69
        %p643 = pneg %p93
        %p644 = pneg %p90
        %p645 = pneg %p114
        %p646 = pneg %p111
        %p647 = pneg %p135
        %p648 = pneg %p132
        %s649 = sand.u32 %s148, 1
        %s650 = scalar_lea.sflag [#allocation4], %s649
        %s651 = sand.u32 %s148, 1
        %s652 = smul.addr %s651, 192
        %s653 = scalar_lea.vmem [#allocation3], %s652
        %p654 = pneg %p161
        %p655 = pneg %p158
        %p656 = scmp.lt.s32.totalorder %s35, 1
        %s657 = scalar_select %p656, %s35, 1
        %s658 = smul.addr %s657, 3
        %s659 = scalar_lea.vmem %s6, %s658
        %p660 = pneg %p187
        %p661 = pneg %p184
        %p662 = scmp.lt.s32.totalorder %s35, 1
        %s663 = scalar_select %p662, %s35, 1
        %s664 = smul.addr %s663, 16
        %s665 = smul.addr %s664, 4
        %s666 = scalar_lea.vmem %s7, %s665
        %p667 = pneg %p213
        %p668 = pneg %p210
        %p669 = scmp.lt.s32.totalorder %s35, 1
        %s670 = scalar_select %p669, %s35, 1
        %s671 = scalar_lea.vmem %s8, %s670
        %p672 = pneg %p239
        %p673 = pneg %p236
        %p674 = scmp.lt.s32.totalorder %s35, 1
        %s675 = scalar_select %p674, %s35, 1
        %s676 = scalar_lea.vmem %s9, %s675
        %p677 = pneg %p265
        %p678 = pneg %p262
        %p679 = scmp.lt.s32.totalorder %s35, 1
        %s680 = scalar_select %p679, %s35, 1
        %s681 = scalar_lea.vmem %s10, %s680
        %p682 = pneg %p291
        %p683 = pneg %p288
        %p684 = scmp.lt.s32.totalorder %s35, 1
        %s685 = scalar_select %p684, %s35, 1
        %s686 = smul.addr %s685, 32
        %s687 = smul.addr %s686, 4
        %s688 = scalar_lea.vmem %s11, %s687
        %p689 = pneg %p317
        %p690 = pneg %p314
        %p691 = scmp.lt.s32.totalorder %s35, 1
        %s692 = scalar_select %p691, %s35, 1
        %s693 = smul.addr %s692, 2
        %s694 = scalar_lea.vmem %s12, %s693
        %p695 = pneg %p343
        %p696 = pneg %p340
        %s697 = sand.u32 %s356, 1
        %s698 = scalar_lea.sflag [#allocation7], %s697
        %s699 = sand.u32 %s356, 1
        %s700 = smul.addr %s699, 128
        %s701 = scalar_lea.vmem [#allocation6], %s700
        %p702 = pneg %p369
        %p703 = pneg %p366
        %p704 = scmp.lt.s32.totalorder %s35, 1
        %s705 = scalar_select %p704, %s35, 1
        %s706 = scalar_lea.vmem %s14, %s705
        %p707 = pneg %p395
        %p708 = pneg %p392
        %p709 = scmp.lt.s32.totalorder %s35, 1
        %s710 = scalar_select %p709, %s35, 1
        %s711 = scalar_lea.vmem %s15, %s710
        %p712 = pneg %p421
        %p713 = pneg %p418
        %p714 = scmp.lt.s32.totalorder %s35, 1
        %s715 = scalar_select %p714, %s35, 1
        %s716 = scalar_lea.vmem %s16, %s715
        %p717 = pneg %p447
        %p718 = pneg %p444
        %p719 = pneg %p468
        %p720 = pneg %p465
        %p721 = scmp.lt.s32.totalorder %s35, 1
        %s722 = scalar_select %p721, %s35, 1
        %s723 = smul.addr %s722, 3
        %s724 = scalar_lea.vmem %s6, %s723
        %p725 = scmp.lt.s32.totalorder %s35, 1
        %s726 = scalar_select %p725, %s35, 1
        %s727 = smul.addr %s726, 16
        %s728 = smul.addr %s727, 4
        %s729 = scalar_lea.vmem %s7, %s728
        %p730 = scmp.lt.s32.totalorder %s35, 1
        %s731 = scalar_select %p730, %s35, 1
        %s732 = scalar_lea.vmem %s8, %s731
        %p733 = scmp.lt.s32.totalorder %s35, 1
        %s734 = scalar_select %p733, %s35, 1
        %s735 = scalar_lea.vmem %s9, %s734
        %p736 = scmp.lt.s32.totalorder %s35, 1
        %s737 = scalar_select %p736, %s35, 1
        %s738 = scalar_lea.vmem %s10, %s737
        %p739 = scmp.lt.s32.totalorder %s35, 1
        %s740 = scalar_select %p739, %s35, 1
        %s741 = smul.addr %s740, 32
        %s742 = smul.addr %s741, 4
        %s743 = scalar_lea.vmem %s11, %s742
        %p744 = scmp.lt.s32.totalorder %s35, 1
        %s745 = scalar_select %p744, %s35, 1
        %s746 = smul.addr %s745, 2
        %s747 = scalar_lea.vmem %s12, %s746
        %p748 = scmp.lt.s32.totalorder %s35, 1
        %s749 = scalar_select %p748, %s35, 1
        %s750 = scalar_lea.vmem %s14, %s749
        %p751 = scmp.lt.s32.totalorder %s35, 1
        %s752 = scalar_select %p751, %s35, 1
        %s753 = scalar_lea.vmem %s15, %s752
        %p754 = scmp.lt.s32.totalorder %s35, 1
        %s755 = scalar_select %p754, %s35, 1
        %s756 = scalar_lea.vmem %s16, %s755
        %p758 = scmp.eq.s32.totalorder %s35, 0
        // Predicated region
        $region97: #{forward.1} parent=87 // pred_check
          %p759 = pneg %p758
        $region98: #{forward.1} parent=87 // pred_check_branch
          %761 = sbr.rel (%p759) target = $region100
        $region99: #{forward.1} parent=87 // pred_region
          %v762 = vld [vmem:[%s0] sm:$0xff]
          %v763 = vld [vmem:[%s0 + $0x8] sm:$0xff]
          %v764 = vld [vmem:[%s3] sm:$0x1]
          %v765 = vld [vmem:[%s4] sm:$0x1]
          %766 = vadd.xlane.f32.xlu0 %v762
          %v767 = vpop.xlane.xlu0 %766
          %768 = vadd.xlane.f32.xlu0 %v763
          %v769 = vpop.xlane.xlu0 %768
          %v770 = vrcp.pop 128.0
          %v771 = vmul.f32 128.0, %v770
          %v772 = vsub.f32 1.0, %v771
          %v773 = vmul.f32 %v770, %v772
          %v774 = vadd.f32 %v770, %v773
          %vm775 = vweird.f32 %v770
          %v776 = vsel %vm775, %v770, %v774
          %v777 = vmul.f32 %v767, %v776
          %v778 = vmul.f32 %v769, %v776
          %v779 = vsub.f32 %v762, %v777
          %v780 = vsub.f32 %v763, %v778
          %v781 = vmul.f32 %v779, %v779
          %v782 = vmul.f32 %v780, %v780
          %783 = vadd.xlane.f32.xlu0 %v781
          %v784 = vpop.xlane.xlu0 %783
          %785 = vadd.xlane.f32.xlu0 %v782
          %v786 = vpop.xlane.xlu0 %785
          %v787 = vmul.f32 %v784, %v776
          %v788 = vmul.f32 %v786, %v776
          %v789 = vadd.f32 %v787, 1e-12
          %v790 = vadd.f32 %v788, 1e-12
          %v791 = vrsqrt.pop %v789
          %v792 = vmul.f32 %v791, %v789
          %v793 = vmul.f32 %v792, %v791
          %v794 = vmul.f32 0.5, %v793
          %v795 = vsub.f32 1.5, %v794
          %v796 = vmul.f32 %v791, %v795
          %vm797 = vweird.f32 %v789
          %vm798 = vweird.f32 %v791
          %vm799 = vmor %vm797, %vm798
          %v800 = vsel %vm799, %v791, %v796
          %v801 = vrsqrt.pop %v790
          %v802 = vmul.f32 %v801, %v790
          %v803 = vmul.f32 %v802, %v801
          %v804 = vmul.f32 0.5, %v803
          %v805 = vsub.f32 1.5, %v804
          %v806 = vmul.f32 %v801, %v805
          %vm807 = vweird.f32 %v790
          %vm808 = vweird.f32 %v801
          %vm809 = vmor %vm807, %vm808
          %v810 = vsel %vm809, %v801, %v806
          %v811 = vmul.f32 %v779, %v800
          %v812 = vmul.f32 %v780, %v810
          %v814 = vperm.slane %v764, 0
          %v816 = vmul.f32 %v811, %v814
          %v817 = vmul.f32 %v812, %v814
          %v819 = vperm.slane %v765, 0
          %v821 = vadd.f32 %v816, %v819
          %v822 = vadd.f32 %v817, %v819
          %823 = vst [vmem:[#allocation2] sm:$0xff] %v821
          %824 = vst [vmem:[#allocation2 + $0x8] sm:$0xff] %v822
        $region100: #{forward.1} parent=87 // pred_fallthru
          _
        %v825 = vld [vmem:[#allocation2] sm:$0xff]
        %v826 = vld [vmem:[#allocation2 + $0x8] sm:$0xff]
        %v827 = vpack.c.bf16 %v826, %v825
        %v828 = vld [vmem:[%s623] sm:$0xff]
        %v829 = vld [vmem:[%s623 + $0x8] sm:$0xf]
        %v830 = vld [vmem:[%s623 + $0xc] sm:$0xff]
        %v831 = vld [vmem:[%s623 + $0x14] sm:$0xf]
        %v832 = vld [vmem:[%s623 + $0x18] sm:$0xff]
        %v833 = vld [vmem:[%s623 + $0x20] sm:$0xf]
        %v834 = vld [vmem:[%s623 + $0x24] sm:$0xff]
        %v835 = vld [vmem:[%s623 + $0x2c] sm:$0xf]
        %v836 = vld [vmem:[%s623 + $0x30] sm:$0xff]
        %v837 = vld [vmem:[%s623 + $0x38] sm:$0xf]
        %v838 = vld [vmem:[%s623 + $0x3c] sm:$0xff]
        %v839 = vld [vmem:[%s623 + $0x44] sm:$0xf]
        %v840 = vld [vmem:[%s623 + $0x48] sm:$0xff]
        %v841 = vld [vmem:[%s623 + $0x50] sm:$0xf]
        %v842 = vld [vmem:[%s623 + $0x54] sm:$0xff]
        %v843 = vld [vmem:[%s623 + $0x5c] sm:$0xf]
        %v844 = vld [vmem:[%s623 + $0x60] sm:$0xff]
        %v845 = vld [vmem:[%s623 + $0x68] sm:$0xf]
        %v846 = vld [vmem:[%s623 + $0x6c] sm:$0xff]
        %v847 = vld [vmem:[%s623 + $0x74] sm:$0xf]
        %v848 = vld [vmem:[%s623 + $0x78] sm:$0xff]
        %v849 = vld [vmem:[%s623 + $0x80] sm:$0xf]
        %v850 = vld [vmem:[%s623 + $0x84] sm:$0xff]
        %v851 = vld [vmem:[%s623 + $0x8c] sm:$0xf]
        %v852 = vld [vmem:[%s623 + $0x90] sm:$0xff]
        %v853 = vld [vmem:[%s623 + $0x98] sm:$0xf]
        %v854 = vld [vmem:[%s623 + $0x9c] sm:$0xff]
        %v855 = vld [vmem:[%s623 + $0xa4] sm:$0xf]
        %v856 = vld [vmem:[%s623 + $0xa8] sm:$0xff]
        %v857 = vld [vmem:[%s623 + $0xb0] sm:$0xf]
        %v858 = vld [vmem:[%s623 + $0xb4] sm:$0xff]
        %v859 = vld [vmem:[%s623 + $0xbc] sm:$0xf]
        %v860 = vld [vmem:[%s724] sm:$0x7]
        %v862 = vperm.slane %v860, 0
        %v863 = vperm.slane %v860, 1
        %v864 = vperm.slane %v860, 2
        %v900 = vunpack.c.l.b16 %v828
        %v901 = vunpack.c.h.b16 %v828
        %v902 = vunpack.c.l.b16 %v829
        %v903 = vunpack.c.l.b16 %v830
        %v904 = vunpack.c.h.b16 %v830
        %v905 = vunpack.c.l.b16 %v831
        %v906 = vunpack.c.l.b16 %v832
        %v907 = vunpack.c.h.b16 %v832
        %v908 = vunpack.c.l.b16 %v833
        %v909 = vunpack.c.l.b16 %v834
        %v910 = vunpack.c.h.b16 %v834
        %v911 = vunpack.c.l.b16 %v835
        %v912 = vunpack.c.l.b16 %v836
        %v913 = vunpack.c.h.b16 %v836
        %v914 = vunpack.c.l.b16 %v837
        %v915 = vunpack.c.l.b16 %v838
        %v916 = vunpack.c.h.b16 %v838
        %v917 = vunpack.c.l.b16 %v839
        %v918 = vunpack.c.l.b16 %v840
        %v919 = vunpack.c.h.b16 %v840
        %v920 = vunpack.c.l.b16 %v841
        %v921 = vunpack.c.l.b16 %v842
        %v922 = vunpack.c.h.b16 %v842
        %v923 = vunpack.c.l.b16 %v843
        %v924 = vunpack.c.l.b16 %v844
        %v925 = vunpack.c.h.b16 %v844
        %v926 = vunpack.c.l.b16 %v845
        %v927 = vunpack.c.l.b16 %v846
        %v928 = vunpack.c.h.b16 %v846
        %v929 = vunpack.c.l.b16 %v847
        %v930 = vunpack.c.l.b16 %v848
        %v931 = vunpack.c.h.b16 %v848
        %v932 = vunpack.c.l.b16 %v849
        %v933 = vunpack.c.l.b16 %v850
        %v934 = vunpack.c.h.b16 %v850
        %v935 = vunpack.c.l.b16 %v851
        %v936 = vunpack.c.l.b16 %v852
        %v937 = vunpack.c.h.b16 %v852
        %v938 = vunpack.c.l.b16 %v853
        %v939 = vunpack.c.l.b16 %v854
        %v940 = vunpack.c.h.b16 %v854
        %v941 = vunpack.c.l.b16 %v855
        %v942 = vunpack.c.l.b16 %v856
        %v943 = vunpack.c.h.b16 %v856
        %v944 = vunpack.c.l.b16 %v857
        %v945 = vunpack.c.l.b16 %v858
        %v946 = vunpack.c.h.b16 %v858
        %v947 = vunpack.c.l.b16 %v859
        %v948 = vpack.c.b16 %v903, %v900
        %v949 = vpack.c.b16 %v904, %v901
        %v950 = vpack.c.b16 %v905, %v902
        %v951 = vpack.c.b16 %v909, %v906
        %v952 = vpack.c.b16 %v910, %v907
        %v953 = vpack.c.b16 %v911, %v908
        %v954 = vpack.c.b16 %v915, %v912
        %v955 = vpack.c.b16 %v916, %v913
        %v956 = vpack.c.b16 %v917, %v914
        %v957 = vpack.c.b16 %v921, %v918
        %v958 = vpack.c.b16 %v922, %v919
        %v959 = vpack.c.b16 %v923, %v920
        %v960 = vpack.c.b16 %v927, %v924
        %v961 = vpack.c.b16 %v928, %v925
        %v962 = vpack.c.b16 %v929, %v926
        %v963 = vpack.c.b16 %v933, %v930
        %v964 = vpack.c.b16 %v934, %v931
        %v965 = vpack.c.b16 %v935, %v932
        %v966 = vpack.c.b16 %v939, %v936
        %v967 = vpack.c.b16 %v940, %v937
        %v968 = vpack.c.b16 %v941, %v938
        %v969 = vpack.c.b16 %v945, %v942
        %v970 = vpack.c.b16 %v946, %v943
        %v971 = vpack.c.b16 %v947, %v944
        %996 = vmatpush.bf16.msra.mxu0 %v969
        %997 = vmatpush.bf16.msra.mxu0 %v966
        %998 = vmatpush.bf16.msra.mxu0 %v963
        %999 = vmatpush.bf16.msra.mxu0 %v960
        %1000 = vmatpush.bf16.msra.mxu0 %v957
        %1001 = vmatpush.bf16.msra.mxu0 %v954
        %1002 = vmatpush.bf16.msra.mxu0 %v951
        %1003 = vmatpush.bf16.msra.mxu0 %v948
        %1004 = vmatmul.bf16.gmra.mxu0 %v827
        %v1005 = vpop.f32.mrf.mxu0
        %v1006 = vadd.f32 %v862, %v1005
        %v1007 = vpop.f32.mrf.mxu0
        %v1008 = vadd.f32 %v862, %v1007
        %1009 = vdwg.mxu0
        %1010 = vmatpush.bf16.msra.mxu0 %v970
        %1011 = vmatpush.bf16.msra.mxu0 %v967
        %1012 = vmatpush.bf16.msra.mxu0 %v964
        %1013 = vmatpush.bf16.msra.mxu0 %v961
        %1014 = vmatpush.bf16.msra.mxu0 %v958
        %1015 = vmatpush.bf16.msra.mxu0 %v955
        %1016 = vmatpush.bf16.msra.mxu0 %v952
        %1017 = vmatpush.bf16.msra.mxu0 %v949
        %1018 = vmatmul.bf16.gmra.mxu0 %v827
        %v1019 = vpop.f32.mrf.mxu0
        %v1020 = vadd.f32 %v863, %v1019
        %v1021 = vpop.f32.mrf.mxu0
        %v1022 = vadd.f32 %v863, %v1021
        %1023 = vdwg.mxu0
        %1024 = vmatpush.bf16.msra.mxu0 %v971
        %1025 = vmatpush.bf16.msra.mxu0 %v968
        %1026 = vmatpush.bf16.msra.mxu0 %v965
        %1027 = vmatpush.bf16.msra.mxu0 %v962
        %1028 = vmatpush.bf16.msra.mxu0 %v959
        %1029 = vmatpush.bf16.msra.mxu0 %v956
        %1030 = vmatpush.bf16.msra.mxu0 %v953
        %1031 = vmatpush.bf16.msra.mxu0 %v950
        %1032 = vmatmul.bf16.gmra.mxu0 %v827
        %v1033 = vpop.f32.mrf.mxu0
        %v1034 = vadd.f32 %v864, %v1033
        %v1035 = vpop.f32.mrf.mxu0
        %v1036 = vadd.f32 %v864, %v1035
        %1037 = vdwg.mxu0
        %v1038 = vpack.c.bf16 %v1020, %v1006
        %v1039 = vpack.c.bf16 %v1034, %v1034
        %v1040 = vpack.c.bf16 %v1022, %v1008
        %v1041 = vpack.c.bf16 %v1036, %v1036
        %1044 = vrot.lane.b32.xlu0 %v1038, 96
        %v1045 = vpop.permute.xlu0 %1044
        %1046 = vrot.lane.b32.xlu0 %v1040, 96
        %v1047 = vpop.permute.xlu0 %1046
        %1048 = vrot.lane.b32.xlu0 %v1038, 64
        %v1049 = vpop.permute.xlu0 %1048
        %1050 = vrot.lane.b32.xlu0 %v1040, 64
        %v1051 = vpop.permute.xlu0 %1050
        %1052 = vrot.lane.b32.xlu0 %v1038, 32
        %v1053 = vpop.permute.xlu0 %1052
        %1054 = vrot.lane.b32.xlu0 %v1040, 32
        %v1055 = vpop.permute.xlu0 %1054
        %v1056 = vrot.slane %v1038, 4
        %v1057 = vrot.slane %v1040, 4
        %v1058 = vrot.slane %v1045, 4
        %v1059 = vrot.slane %v1047, 4
        %v1060 = vrot.slane %v1049, 4
        %v1061 = vrot.slane %v1051, 4
        %v1062 = vrot.slane %v1053, 4
        %v1063 = vrot.slane %v1055, 4
        %1066 = vrot.lane.b32.xlu0 %v1039, 96
        %v1067 = vpop.permute.xlu0 %1066
        %1068 = vrot.lane.b32.xlu0 %v1041, 96
        %v1069 = vpop.permute.xlu0 %1068
        %1070 = vrot.lane.b32.xlu0 %v1039, 64
        %v1071 = vpop.permute.xlu0 %1070
        %1072 = vrot.lane.b32.xlu0 %v1041, 64
        %v1073 = vpop.permute.xlu0 %1072
        %1074 = vrot.lane.b32.xlu0 %v1039, 32
        %v1075 = vpop.permute.xlu0 %1074
        %1076 = vrot.lane.b32.xlu0 %v1041, 32
        %v1077 = vpop.permute.xlu0 %1076
        %v1078 = vld [vmem:[%s1] sm:$0xff]
        %v1079 = vld [vmem:[%s1 + $0x8] sm:$0xff]
        %v1080 = vunpack.c.l.b16 %v1038
        %v1081 = vunpack.c.l.b16 %v1040
        %v1082 = vpack.c.b16 %v1081, %v1080
        %v1083 = vunpack.c.l.b16 %v1056
        %v1084 = vunpack.c.l.b16 %v1057
        %v1085 = vpack.c.b16 %v1084, %v1083
        %vm1086 = vcmask 261120
        %v1088 = vsel %vm1086, %v1082, 0
        %v1091 = vsel %vm1086, %v1085, 0
        %1093 = vmatpush.bf16.xpose.msra.mxu0 0
        %1094 = vmatpush.bf16.xpose.msra.mxu0 0
        %1095 = vmatpush.bf16.xpose.msra.mxu0 0
        %1096 = vmatpush.bf16.xpose.msra.mxu0 0
        %1097 = vmatpush.bf16.xpose.msra.mxu0 0
        %1098 = vmatpush.bf16.xpose.msra.mxu0 0
        %1099 = vmatpush.bf16.xpose.msra.mxu0 0
        %1100 = vmatpush.bf16.xpose.msra.mxu0 %v1091
        %1101 = vmatmul.bf16.gmra.mxu0 %v1088
        %v1102 = vpop.f32.mrf.mxu0
        %v1103 = vadd.f32 %v1078, %v1102
        %v1104 = vpop.f32.mrf.mxu0
        %v1105 = vadd.f32 %v1079, %v1104
        %1106 = vdwg.mxu0
        %v1107 = vunpack.c.l.b16 %v1045
        %v1108 = vunpack.c.l.b16 %v1047
        %v1109 = vpack.c.b16 %v1108, %v1107
        %v1110 = vunpack.c.l.b16 %v1058
        %v1111 = vunpack.c.l.b16 %v1059
        %v1112 = vpack.c.b16 %v1111, %v1110
        %v1114 = vsel %vm1086, %v1109, 0
        %v1117 = vsel %vm1086, %v1112, 0
        %1119 = vmatpush.bf16.xpose.msra.mxu0 0
        %1120 = vmatpush.bf16.xpose.msra.mxu0 0
        %1121 = vmatpush.bf16.xpose.msra.mxu0 0
        %1122 = vmatpush.bf16.xpose.msra.mxu0 0
        %1123 = vmatpush.bf16.xpose.msra.mxu0 0
        %1124 = vmatpush.bf16.xpose.msra.mxu0 0
        %1125 = vmatpush.bf16.xpose.msra.mxu0 0
        %1126 = vmatpush.bf16.xpose.msra.mxu0 %v1117
        %1127 = vmatmul.bf16.gmra.mxu0 %v1114
        %v1128 = vpop.f32.mrf.mxu0
        %v1129 = vadd.f32 %v1078, %v1128
        %v1130 = vpop.f32.mrf.mxu0
        %v1131 = vadd.f32 %v1079, %v1130
        %1132 = vdwg.mxu0
        %v1133 = vunpack.c.l.b16 %v1049
        %v1134 = vunpack.c.l.b16 %v1051
        %v1135 = vpack.c.b16 %v1134, %v1133
        %v1136 = vunpack.c.l.b16 %v1060
        %v1137 = vunpack.c.l.b16 %v1061
        %v1138 = vpack.c.b16 %v1137, %v1136
        %v1140 = vsel %vm1086, %v1135, 0
        %v1143 = vsel %vm1086, %v1138, 0
        %1145 = vmatpush.bf16.xpose.msra.mxu0 0
        %1146 = vmatpush.bf16.xpose.msra.mxu0 0
        %1147 = vmatpush.bf16.xpose.msra.mxu0 0
        %1148 = vmatpush.bf16.xpose.msra.mxu0 0
        %1149 = vmatpush.bf16.xpose.msra.mxu0 0
        %1150 = vmatpush.bf16.xpose.msra.mxu0 0
        %1151 = vmatpush.bf16.xpose.msra.mxu0 0
        %1152 = vmatpush.bf16.xpose.msra.mxu0 %v1143
        %1153 = vmatmul.bf16.gmra.mxu0 %v1140
        %v1154 = vpop.f32.mrf.mxu0
        %v1155 = vadd.f32 %v1078, %v1154
        %v1156 = vpop.f32.mrf.mxu0
        %v1157 = vadd.f32 %v1079, %v1156
        %1158 = vdwg.mxu0
        %v1159 = vunpack.c.l.b16 %v1053
        %v1160 = vunpack.c.l.b16 %v1055
        %v1161 = vpack.c.b16 %v1160, %v1159
        %v1162 = vunpack.c.l.b16 %v1062
        %v1163 = vunpack.c.l.b16 %v1063
        %v1164 = vpack.c.b16 %v1163, %v1162
        %v1166 = vsel %vm1086, %v1161, 0
        %v1169 = vsel %vm1086, %v1164, 0
        %1171 = vmatpush.bf16.xpose.msra.mxu0 0
        %1172 = vmatpush.bf16.xpose.msra.mxu0 0
        %1173 = vmatpush.bf16.xpose.msra.mxu0 0
        %1174 = vmatpush.bf16.xpose.msra.mxu0 0
        %1175 = vmatpush.bf16.xpose.msra.mxu0 0
        %1176 = vmatpush.bf16.xpose.msra.mxu0 0
        %1177 = vmatpush.bf16.xpose.msra.mxu0 0
        %1178 = vmatpush.bf16.xpose.msra.mxu0 %v1169
        %1179 = vmatmul.bf16.gmra.mxu0 %v1166
        %v1180 = vpop.f32.mrf.mxu0
        %v1181 = vadd.f32 %v1078, %v1180
        %v1182 = vpop.f32.mrf.mxu0
        %v1183 = vadd.f32 %v1079, %v1182
        %1184 = vdwg.mxu0
        %vm1185 = vcmask 130048
        %v1186 = vsel %vm1185, %v1103, -inf
        %1187 = vmax.xlane.f32.xlu0 %v1186
        %v1188 = vpop.xlane.xlu0 %1187
        %v1189 = vsel %vm1185, %v1105, -inf
        %1190 = vmax.xlane.f32.xlu0 %v1189
        %v1191 = vpop.xlane.xlu0 %1190
        %v1192 = vsel %vm1185, %v1129, -inf
        %1193 = vmax.xlane.f32.xlu0 %v1192
        %v1194 = vpop.xlane.xlu0 %1193
        %v1195 = vsel %vm1185, %v1131, -inf
        %1196 = vmax.xlane.f32.xlu0 %v1195
        %v1197 = vpop.xlane.xlu0 %1196
        %v1198 = vsel %vm1185, %v1155, -inf
        %1199 = vmax.xlane.f32.xlu0 %v1198
        %v1200 = vpop.xlane.xlu0 %1199
        %v1201 = vsel %vm1185, %v1157, -inf
        %1202 = vmax.xlane.f32.xlu0 %v1201
        %v1203 = vpop.xlane.xlu0 %1202
        %v1204 = vsel %vm1185, %v1181, -inf
        %1205 = vmax.xlane.f32.xlu0 %v1204
        %v1206 = vpop.xlane.xlu0 %1205
        %v1207 = vsel %vm1185, %v1183, -inf
        %1208 = vmax.xlane.f32.xlu0 %v1207
        %v1209 = vpop.xlane.xlu0 %1208
        %v1210 = vsub.f32 %v1103, %v1188
        %v1211 = vsub.f32 %v1105, %v1191
        %v1212 = vsub.f32 %v1129, %v1194
        %v1213 = vsub.f32 %v1131, %v1197
        %v1214 = vsub.f32 %v1155, %v1200
        %v1215 = vsub.f32 %v1157, %v1203
        %v1216 = vsub.f32 %v1181, %v1206
        %v1217 = vsub.f32 %v1183, %v1209
        %v1218 = vmul.f32 %v1210, 1.442695
        %v1219 = vpow.pop %v1218
        %v1220 = vmul.f32 %v1211, 1.442695
        %v1221 = vpow.pop %v1220
        %v1222 = vmul.f32 %v1212, 1.442695
        %v1223 = vpow.pop %v1222
        %v1224 = vmul.f32 %v1213, 1.442695
        %v1225 = vpow.pop %v1224
        %v1226 = vmul.f32 %v1214, 1.442695
        %v1227 = vpow.pop %v1226
        %v1228 = vmul.f32 %v1215, 1.442695
        %v1229 = vpow.pop %v1228
        %v1230 = vmul.f32 %v1216, 1.442695
        %v1231 = vpow.pop %v1230
        %v1232 = vmul.f32 %v1217, 1.442695
        %v1233 = vpow.pop %v1232
        %v1234 = vsel %vm1185, %v1219, 0.0
        %1235 = vadd.xlane.f32.xlu0 %v1234
        %v1236 = vpop.xlane.xlu0 %1235
        %v1237 = vsel %vm1185, %v1221, 0.0
        %1238 = vadd.xlane.f32.xlu0 %v1237
        %v1239 = vpop.xlane.xlu0 %1238
        %v1240 = vsel %vm1185, %v1223, 0.0
        %1241 = vadd.xlane.f32.xlu0 %v1240
        %v1242 = vpop.xlane.xlu0 %1241
        %v1243 = vsel %vm1185, %v1225, 0.0
        %1244 = vadd.xlane.f32.xlu0 %v1243
        %v1245 = vpop.xlane.xlu0 %1244
        %v1246 = vsel %vm1185, %v1227, 0.0
        %1247 = vadd.xlane.f32.xlu0 %v1246
        %v1248 = vpop.xlane.xlu0 %1247
        %v1249 = vsel %vm1185, %v1229, 0.0
        %1250 = vadd.xlane.f32.xlu0 %v1249
        %v1251 = vpop.xlane.xlu0 %1250
        %v1252 = vsel %vm1185, %v1231, 0.0
        %1253 = vadd.xlane.f32.xlu0 %v1252
        %v1254 = vpop.xlane.xlu0 %1253
        %v1255 = vsel %vm1185, %v1233, 0.0
        %1256 = vadd.xlane.f32.xlu0 %v1255
        %v1257 = vpop.xlane.xlu0 %1256
        %v1258 = vrcp.pop %v1236
        %v1259 = vrcp.pop %v1239
        %v1260 = vrcp.pop %v1242
        %v1261 = vrcp.pop %v1245
        %v1262 = vrcp.pop %v1248
        %v1263 = vrcp.pop %v1251
        %v1264 = vrcp.pop %v1254
        %v1265 = vrcp.pop %v1257
        %v1266 = vmul.f32 %v1219, %v1258
        %v1267 = vmul.f32 %v1221, %v1259
        %v1268 = vmul.f32 %v1223, %v1260
        %v1269 = vmul.f32 %v1225, %v1261
        %v1270 = vmul.f32 %v1227, %v1262
        %v1271 = vmul.f32 %v1229, %v1263
        %v1272 = vmul.f32 %v1231, %v1264
        %v1273 = vmul.f32 %v1233, %v1265
        %v1274 = vpack.c.bf16 %v1266, %v1266
        %v1275 = vpack.c.bf16 %v1267, %v1267
        %v1276 = vpack.c.bf16 %v1268, %v1268
        %v1277 = vpack.c.bf16 %v1269, %v1269
        %v1278 = vpack.c.bf16 %v1270, %v1270
        %v1279 = vpack.c.bf16 %v1271, %v1271
        %v1280 = vpack.c.bf16 %v1272, %v1272
        %v1281 = vpack.c.bf16 %v1273, %v1273
        %v1284 = vunpack.c.l.b16 %v1274
        %v1285 = vunpack.c.l.b16 %v1275
        %v1286 = vpack.c.b16 %v1285, %v1284
        %v1287 = vunpack.c.l.b16 %v1039
        %v1288 = vunpack.c.l.b16 %v1041
        %v1289 = vpack.c.b16 %v1288, %v1287
        %v1292 = vsel %vm1185, %v1286, 0
        %1294 = vmatpush.bf16.msra.mxu0 0
        %1295 = vmatpush.bf16.msra.mxu0 0
        %1296 = vmatpush.bf16.msra.mxu0 0
        %1297 = vmatpush.bf16.msra.mxu0 0
        %1298 = vmatpush.bf16.msra.mxu0 0
        %1299 = vmatpush.bf16.msra.mxu0 0
        %1300 = vmatpush.bf16.msra.mxu0 0
        %1301 = vmatpush.bf16.msra.mxu0 %v1289
        %1302 = vmatmul.bf16.gmra.mxu0 %v1292
        %v1303 = vpop.f32.mrf.mxu0
        %v1304 = vadd.f32 0.0, %v1303
        %v1305 = vpop.f32.mrf.mxu0
        %v1306 = vadd.f32 0.0, %v1305
        %1307 = vdwg.mxu0
        %v1310 = vunpack.c.l.b16 %v1276
        %v1311 = vunpack.c.l.b16 %v1277
        %v1312 = vpack.c.b16 %v1311, %v1310
        %v1313 = vunpack.c.l.b16 %v1067
        %v1314 = vunpack.c.l.b16 %v1069
        %v1315 = vpack.c.b16 %v1314, %v1313
        %v1318 = vsel %vm1185, %v1312, 0
        %1320 = vmatpush.bf16.msra.mxu0 0
        %1321 = vmatpush.bf16.msra.mxu0 0
        %1322 = vmatpush.bf16.msra.mxu0 0
        %1323 = vmatpush.bf16.msra.mxu0 0
        %1324 = vmatpush.bf16.msra.mxu0 0
        %1325 = vmatpush.bf16.msra.mxu0 0
        %1326 = vmatpush.bf16.msra.mxu0 0
        %1327 = vmatpush.bf16.msra.mxu0 %v1315
        %1328 = vmatmul.bf16.gmra.mxu0 %v1318
        %v1329 = vpop.f32.mrf.mxu0
        %v1330 = vadd.f32 0.0, %v1329
        %v1331 = vpop.f32.mrf.mxu0
        %v1332 = vadd.f32 0.0, %v1331
        %1333 = vdwg.mxu0
        %v1336 = vunpack.c.l.b16 %v1278
        %v1337 = vunpack.c.l.b16 %v1279
        %v1338 = vpack.c.b16 %v1337, %v1336
        %v1339 = vunpack.c.l.b16 %v1071
        %v1340 = vunpack.c.l.b16 %v1073
        %v1341 = vpack.c.b16 %v1340, %v1339
        %v1344 = vsel %vm1185, %v1338, 0
        %1346 = vmatpush.bf16.msra.mxu0 0
        %1347 = vmatpush.bf16.msra.mxu0 0
        %1348 = vmatpush.bf16.msra.mxu0 0
        %1349 = vmatpush.bf16.msra.mxu0 0
        %1350 = vmatpush.bf16.msra.mxu0 0
        %1351 = vmatpush.bf16.msra.mxu0 0
        %1352 = vmatpush.bf16.msra.mxu0 0
        %1353 = vmatpush.bf16.msra.mxu0 %v1341
        %1354 = vmatmul.bf16.gmra.mxu0 %v1344
        %v1355 = vpop.f32.mrf.mxu0
        %v1356 = vadd.f32 0.0, %v1355
        %v1357 = vpop.f32.mrf.mxu0
        %v1358 = vadd.f32 0.0, %v1357
        %1359 = vdwg.mxu0
        %v1362 = vunpack.c.l.b16 %v1280
        %v1363 = vunpack.c.l.b16 %v1281
        %v1364 = vpack.c.b16 %v1363, %v1362
        %v1365 = vunpack.c.l.b16 %v1075
        %v1366 = vunpack.c.l.b16 %v1077
        %v1367 = vpack.c.b16 %v1366, %v1365
        %v1370 = vsel %vm1185, %v1364, 0
        %1372 = vmatpush.bf16.msra.mxu0 0
        %1373 = vmatpush.bf16.msra.mxu0 0
        %1374 = vmatpush.bf16.msra.mxu0 0
        %1375 = vmatpush.bf16.msra.mxu0 0
        %1376 = vmatpush.bf16.msra.mxu0 0
        %1377 = vmatpush.bf16.msra.mxu0 0
        %1378 = vmatpush.bf16.msra.mxu0 0
        %1379 = vmatpush.bf16.msra.mxu0 %v1367
        %1380 = vmatmul.bf16.gmra.mxu0 %v1370
        %v1381 = vpop.f32.mrf.mxu0
        %v1382 = vadd.f32 0.0, %v1381
        %v1383 = vpop.f32.mrf.mxu0
        %v1384 = vadd.f32 0.0, %v1383
        %1385 = vdwg.mxu0
        %v1386 = vpack.c.bf16 %v1304, %v1304
        %v1387 = vpack.c.bf16 %v1306, %v1306
        %v1388 = vpack.c.bf16 %v1330, %v1330
        %v1389 = vpack.c.bf16 %v1332, %v1332
        %v1390 = vpack.c.bf16 %v1356, %v1356
        %v1391 = vpack.c.bf16 %v1358, %v1358
        %v1392 = vpack.c.bf16 %v1382, %v1382
        %v1393 = vpack.c.bf16 %v1384, %v1384
        %v1394 = vld [vmem:[%s729] sm:$0xf]
        %v1395 = vld [vmem:[%s729 + $0x4] sm:$0xf]
        %v1396 = vld [vmem:[%s729 + $0x8] sm:$0xf]
        %v1397 = vld [vmem:[%s729 + $0xc] sm:$0xf]
        %v1398 = vld [vmem:[%s729 + $0x10] sm:$0xf]
        %v1399 = vld [vmem:[%s729 + $0x14] sm:$0xf]
        %v1400 = vld [vmem:[%s729 + $0x18] sm:$0xf]
        %v1401 = vld [vmem:[%s729 + $0x1c] sm:$0xf]
        %v1402 = vld [vmem:[%s729 + $0x20] sm:$0xf]
        %v1403 = vld [vmem:[%s729 + $0x24] sm:$0xf]
        %v1404 = vld [vmem:[%s729 + $0x28] sm:$0xf]
        %v1405 = vld [vmem:[%s729 + $0x2c] sm:$0xf]
        %v1406 = vld [vmem:[%s729 + $0x30] sm:$0xf]
        %v1407 = vld [vmem:[%s729 + $0x34] sm:$0xf]
        %v1408 = vld [vmem:[%s729 + $0x38] sm:$0xf]
        %v1409 = vld [vmem:[%s729 + $0x3c] sm:$0xf]
        %v1412 = vunpack.c.l.b16 %v1386
        %v1413 = vunpack.c.l.b16 %v1387
        %v1414 = vpack.c.b16 %v1413, %v1412
        %v1419 = vunpack.c.l.b16 %v1394
        %v1420 = vunpack.c.l.b16 %v1395
        %v1421 = vunpack.c.l.b16 %v1396
        %v1422 = vunpack.c.l.b16 %v1397
        %v1423 = vpack.c.b16 %v1420, %v1419
        %v1424 = vpack.c.b16 %v1422, %v1421
        %v1428 = vsel %vm1086, %v1414, 0
        %1430 = vmatpush.bf16.msra.mxu0 0
        %1431 = vmatpush.bf16.msra.mxu0 0
        %1432 = vmatpush.bf16.msra.mxu0 0
        %1433 = vmatpush.bf16.msra.mxu0 0
        %1434 = vmatpush.bf16.msra.mxu0 0
        %1435 = vmatpush.bf16.msra.mxu0 0
        %1436 = vmatpush.bf16.msra.mxu0 %v1424
        %1437 = vmatpush.bf16.msra.mxu0 %v1423
        %1438 = vmatmul.bf16.gmra.mxu0 %v1428
        %v1439 = vpop.f32.mrf.mxu0
        %v1440 = vadd.f32 0.0, %v1439
        %v1441 = vpop.f32.mrf.mxu0
        %v1442 = vadd.f32 0.0, %v1441
        %1443 = vdwg.mxu0
        %v1446 = vunpack.c.l.b16 %v1388
        %v1447 = vunpack.c.l.b16 %v1389
        %v1448 = vpack.c.b16 %v1447, %v1446
        %v1453 = vunpack.c.l.b16 %v1398
        %v1454 = vunpack.c.l.b16 %v1399
        %v1455 = vunpack.c.l.b16 %v1400
        %v1456 = vunpack.c.l.b16 %v1401
        %v1457 = vpack.c.b16 %v1454, %v1453
        %v1458 = vpack.c.b16 %v1456, %v1455
        %v1462 = vsel %vm1086, %v1448, 0
        %1464 = vmatpush.bf16.msra.mxu0 0
        %1465 = vmatpush.bf16.msra.mxu0 0
        %1466 = vmatpush.bf16.msra.mxu0 0
        %1467 = vmatpush.bf16.msra.mxu0 0
        %1468 = vmatpush.bf16.msra.mxu0 0
        %1469 = vmatpush.bf16.msra.mxu0 0
        %1470 = vmatpush.bf16.msra.mxu0 %v1458
        %1471 = vmatpush.bf16.msra.mxu0 %v1457
        %1472 = vmatmul.bf16.gmra.mxu0 %v1462
        %v1473 = vpop.f32.mrf.mxu0
        %v1474 = vadd.f32 0.0, %v1473
        %v1475 = vpop.f32.mrf.mxu0
        %v1476 = vadd.f32 0.0, %v1475
        %1477 = vdwg.mxu0
        %v1480 = vunpack.c.l.b16 %v1390
        %v1481 = vunpack.c.l.b16 %v1391
        %v1482 = vpack.c.b16 %v1481, %v1480
        %v1487 = vunpack.c.l.b16 %v1402
        %v1488 = vunpack.c.l.b16 %v1403
        %v1489 = vunpack.c.l.b16 %v1404
        %v1490 = vunpack.c.l.b16 %v1405
        %v1491 = vpack.c.b16 %v1488, %v1487
        %v1492 = vpack.c.b16 %v1490, %v1489
        %v1496 = vsel %vm1086, %v1482, 0
        %1498 = vmatpush.bf16.msra.mxu0 0
        %1499 = vmatpush.bf16.msra.mxu0 0
        %1500 = vmatpush.bf16.msra.mxu0 0
        %1501 = vmatpush.bf16.msra.mxu0 0
        %1502 = vmatpush.bf16.msra.mxu0 0
        %1503 = vmatpush.bf16.msra.mxu0 0
        %1504 = vmatpush.bf16.msra.mxu0 %v1492
        %1505 = vmatpush.bf16.msra.mxu0 %v1491
        %1506 = vmatmul.bf16.gmra.mxu0 %v1496
        %v1507 = vpop.f32.mrf.mxu0
        %v1508 = vadd.f32 0.0, %v1507
        %v1509 = vpop.f32.mrf.mxu0
        %v1510 = vadd.f32 0.0, %v1509
        %1511 = vdwg.mxu0
        %v1514 = vunpack.c.l.b16 %v1392
        %v1515 = vunpack.c.l.b16 %v1393
        %v1516 = vpack.c.b16 %v1515, %v1514
        %v1521 = vunpack.c.l.b16 %v1406
        %v1522 = vunpack.c.l.b16 %v1407
        %v1523 = vunpack.c.l.b16 %v1408
        %v1524 = vunpack.c.l.b16 %v1409
        %v1525 = vpack.c.b16 %v1522, %v1521
        %v1526 = vpack.c.b16 %v1524, %v1523
        %v1530 = vsel %vm1086, %v1516, 0
        %1532 = vmatpush.bf16.msra.mxu0 0
        %1533 = vmatpush.bf16.msra.mxu0 0
        %1534 = vmatpush.bf16.msra.mxu0 0
        %1535 = vmatpush.bf16.msra.mxu0 0
        %1536 = vmatpush.bf16.msra.mxu0 0
        %1537 = vmatpush.bf16.msra.mxu0 0
        %1538 = vmatpush.bf16.msra.mxu0 %v1526
        %1539 = vmatpush.bf16.msra.mxu0 %v1525
        %1540 = vmatmul.bf16.gmra.mxu0 %v1530
        %v1541 = vpop.f32.mrf.mxu0
        %v1542 = vadd.f32 0.0, %v1541
        %v1543 = vpop.f32.mrf.mxu0
        %v1544 = vadd.f32 0.0, %v1543
        %1545 = vdwg.mxu0
        %v1546 = vld [vmem:[%s732] sm:$0x1]
        %v1548 = vperm.slane %v1546, 0
        %v1550 = vadd.f32 %v1548, %v1440
        %v1551 = vadd.f32 %v1548, %v1442
        %v1552 = vadd.f32 %v1550, %v1474
        %v1553 = vadd.f32 %v1551, %v1476
        %v1554 = vadd.f32 %v1552, %v1508
        %v1555 = vadd.f32 %v1553, %v1510
        %v1556 = vadd.f32 %v1554, %v1542
        %v1557 = vadd.f32 %v1555, %v1544
        %v1558 = vadd.f32 %v1556, %v825
        %v1559 = vadd.f32 %v1557, %v826
        %v1560 = vld [vmem:[%s735] sm:$0x1]
        %v1561 = vld [vmem:[%s738] sm:$0x1]
        %1562 = vadd.xlane.f32.xlu0 %v1558
        %v1563 = vpop.xlane.xlu0 %1562
        %1564 = vadd.xlane.f32.xlu0 %v1559
        %v1565 = vpop.xlane.xlu0 %1564
        %v1566 = vrcp.pop 128.0
        %v1567 = vmul.f32 128.0, %v1566
        %v1568 = vsub.f32 1.0, %v1567
        %v1569 = vmul.f32 %v1566, %v1568
        %v1570 = vadd.f32 %v1566, %v1569
        %vm1571 = vweird.f32 %v1566
        %v1572 = vsel %vm1571, %v1566, %v1570
        %v1573 = vmul.f32 %v1563, %v1572
        %v1574 = vmul.f32 %v1565, %v1572
        %v1575 = vsub.f32 %v1558, %v1573
        %v1576 = vsub.f32 %v1559, %v1574
        %v1577 = vmul.f32 %v1575, %v1575
        %v1578 = vmul.f32 %v1576, %v1576
        %1579 = vadd.xlane.f32.xlu0 %v1577
        %v1580 = vpop.xlane.xlu0 %1579
        %1581 = vadd.xlane.f32.xlu0 %v1578
        %v1582 = vpop.xlane.xlu0 %1581
        %v1583 = vmul.f32 %v1580, %v1572
        %v1584 = vmul.f32 %v1582, %v1572
        %v1585 = vadd.f32 %v1583, 1e-12
        %v1586 = vadd.f32 %v1584, 1e-12
        %v1587 = vrsqrt.pop %v1585
        %v1588 = vmul.f32 %v1587, %v1585
        %v1589 = vmul.f32 %v1588, %v1587
        %v1590 = vmul.f32 0.5, %v1589
        %v1591 = vsub.f32 1.5, %v1590
        %v1592 = vmul.f32 %v1587, %v1591
        %vm1593 = vweird.f32 %v1585
        %vm1594 = vweird.f32 %v1587
        %vm1595 = vmor %vm1593, %vm1594
        %v1596 = vsel %vm1595, %v1587, %v1592
        %v1597 = vrsqrt.pop %v1586
        %v1598 = vmul.f32 %v1597, %v1586
        %v1599 = vmul.f32 %v1598, %v1597
        %v1600 = vmul.f32 0.5, %v1599
        %v1601 = vsub.f32 1.5, %v1600
        %v1602 = vmul.f32 %v1597, %v1601
        %vm1603 = vweird.f32 %v1586
        %vm1604 = vweird.f32 %v1597
        %vm1605 = vmor %vm1603, %vm1604
        %v1606 = vsel %vm1605, %v1597, %v1602
        %v1607 = vmul.f32 %v1575, %v1596
        %v1608 = vmul.f32 %v1576, %v1606
        %v1610 = vperm.slane %v1560, 0
        %v1612 = vmul.f32 %v1607, %v1610
        %v1613 = vmul.f32 %v1608, %v1610
        %v1615 = vperm.slane %v1561, 0
        %v1617 = vadd.f32 %v1612, %v1615
        %v1618 = vadd.f32 %v1613, %v1615
        %v1619 = vpack.c.bf16 %v1618, %v1617
        %v1620 = vld [vmem:[%s743] sm:$0xff]
        %v1621 = vld [vmem:[%s743 + $0x8] sm:$0xff]
        %v1622 = vld [vmem:[%s743 + $0x10] sm:$0xff]
        %v1623 = vld [vmem:[%s743 + $0x18] sm:$0xff]
        %v1624 = vld [vmem:[%s743 + $0x20] sm:$0xff]
        %v1625 = vld [vmem:[%s743 + $0x28] sm:$0xff]
        %v1626 = vld [vmem:[%s743 + $0x30] sm:$0xff]
        %v1627 = vld [vmem:[%s743 + $0x38] sm:$0xff]
        %v1628 = vld [vmem:[%s743 + $0x40] sm:$0xff]
        %v1629 = vld [vmem:[%s743 + $0x48] sm:$0xff]
        %v1630 = vld [vmem:[%s743 + $0x50] sm:$0xff]
        %v1631 = vld [vmem:[%s743 + $0x58] sm:$0xff]
        %v1632 = vld [vmem:[%s743 + $0x60] sm:$0xff]
        %v1633 = vld [vmem:[%s743 + $0x68] sm:$0xff]
        %v1634 = vld [vmem:[%s743 + $0x70] sm:$0xff]
        %v1635 = vld [vmem:[%s743 + $0x78] sm:$0xff]
        %v1636 = vld [vmem:[%s747] sm:$0x3]
        %v1638 = vperm.slane %v1636, 0
        %v1639 = vperm.slane %v1636, 1
        %v1658 = vunpack.c.l.b16 %v1620
        %v1659 = vunpack.c.h.b16 %v1620
        %v1660 = vunpack.c.l.b16 %v1621
        %v1661 = vunpack.c.h.b16 %v1621
        %v1662 = vunpack.c.l.b16 %v1622
        %v1663 = vunpack.c.h.b16 %v1622
        %v1664 = vunpack.c.l.b16 %v1623
        %v1665 = vunpack.c.h.b16 %v1623
        %v1666 = vunpack.c.l.b16 %v1624
        %v1667 = vunpack.c.h.b16 %v1624
        %v1668 = vunpack.c.l.b16 %v1625
        %v1669 = vunpack.c.h.b16 %v1625
        %v1670 = vunpack.c.l.b16 %v1626
        %v1671 = vunpack.c.h.b16 %v1626
        %v1672 = vunpack.c.l.b16 %v1627
        %v1673 = vunpack.c.h.b16 %v1627
        %v1674 = vunpack.c.l.b16 %v1628
        %v1675 = vunpack.c.h.b16 %v1628
        %v1676 = vunpack.c.l.b16 %v1629
        %v1677 = vunpack.c.h.b16 %v1629
        %v1678 = vunpack.c.l.b16 %v1630
        %v1679 = vunpack.c.h.b16 %v1630
        %v1680 = vunpack.c.l.b16 %v1631
        %v1681 = vunpack.c.h.b16 %v1631
        %v1682 = vunpack.c.l.b16 %v1632
        %v1683 = vunpack.c.h.b16 %v1632
        %v1684 = vunpack.c.l.b16 %v1633
        %v1685 = vunpack.c.h.b16 %v1633
        %v1686 = vunpack.c.l.b16 %v1634
        %v1687 = vunpack.c.h.b16 %v1634
        %v1688 = vunpack.c.l.b16 %v1635
        %v1689 = vunpack.c.h.b16 %v1635
        %v1690 = vpack.c.b16 %v1660, %v1658
        %v1691 = vpack.c.b16 %v1661, %v1659
        %v1692 = vpack.c.b16 %v1664, %v1662
        %v1693 = vpack.c.b16 %v1665, %v1663
        %v1694 = vpack.c.b16 %v1668, %v1666
        %v1695 = vpack.c.b16 %v1669, %v1667
        %v1696 = vpack.c.b16 %v1672, %v1670
        %v1697 = vpack.c.b16 %v1673, %v1671
        %v1698 = vpack.c.b16 %v1676, %v1674
        %v1699 = vpack.c.b16 %v1677, %v1675
        %v1700 = vpack.c.b16 %v1680, %v1678
        %v1701 = vpack.c.b16 %v1681, %v1679
        %v1702 = vpack.c.b16 %v1684, %v1682
        %v1703 = vpack.c.b16 %v1685, %v1683
        %v1704 = vpack.c.b16 %v1688, %v1686
        %v1705 = vpack.c.b16 %v1689, %v1687
        %1722 = vmatpush.bf16.msra.mxu0 %v1704
        %1723 = vmatpush.bf16.msra.mxu0 %v1702
        %1724 = vmatpush.bf16.msra.mxu0 %v1700
        %1725 = vmatpush.bf16.msra.mxu0 %v1698
        %1726 = vmatpush.bf16.msra.mxu0 %v1696
        %1727 = vmatpush.bf16.msra.mxu0 %v1694
        %1728 = vmatpush.bf16.msra.mxu0 %v1692
        %1729 = vmatpush.bf16.msra.mxu0 %v1690
        %1730 = vmatmul.bf16.gmra.mxu0 %v1619
        %v1731 = vpop.f32.mrf.mxu0
        %v1732 = vadd.f32 %v1638, %v1731
        %v1733 = vpop.f32.mrf.mxu0
        %v1734 = vadd.f32 %v1638, %v1733
        %1735 = vdwg.mxu0
        %1736 = vmatpush.bf16.msra.mxu0 %v1705
        %1737 = vmatpush.bf16.msra.mxu0 %v1703
        %1738 = vmatpush.bf16.msra.mxu0 %v1701
        %1739 = vmatpush.bf16.msra.mxu0 %v1699
        %1740 = vmatpush.bf16.msra.mxu0 %v1697
        %1741 = vmatpush.bf16.msra.mxu0 %v1695
        %1742 = vmatpush.bf16.msra.mxu0 %v1693
        %1743 = vmatpush.bf16.msra.mxu0 %v1691
        %1744 = vmatmul.bf16.gmra.mxu0 %v1619
        %v1745 = vpop.f32.mrf.mxu0
        %v1746 = vadd.f32 %v1639, %v1745
        %v1747 = vpop.f32.mrf.mxu0
        %v1748 = vadd.f32 %v1639, %v1747
        %1749 = vdwg.mxu0
        %v1750 = vmul.f32 %v1732, %v1732
        %v1751 = vmul.f32 %v1746, %v1746
        %v1752 = vmul.f32 %v1734, %v1734
        %v1753 = vmul.f32 %v1748, %v1748
        %v1754 = vmul.f32 %v1732, %v1750
        %v1755 = vmul.f32 %v1746, %v1751
        %v1756 = vmul.f32 %v1734, %v1752
        %v1757 = vmul.f32 %v1748, %v1753
        %v1758 = vmul.f32 %v1754, 0.044715
        %v1759 = vmul.f32 %v1755, 0.044715
        %v1760 = vmul.f32 %v1756, 0.044715
        %v1761 = vmul.f32 %v1757, 0.044715
        %v1762 = vadd.f32 %v1732, %v1758
        %v1763 = vadd.f32 %v1746, %v1759
        %v1764 = vadd.f32 %v1734, %v1760
        %v1765 = vadd.f32 %v1748, %v1761
        %v1766 = vmul.f32 %v1762, 0.7978846
        %v1767 = vmul.f32 %v1763, 0.7978846
        %v1768 = vmul.f32 %v1764, 0.7978846
        %v1769 = vmul.f32 %v1765, 0.7978846
        %v1770 = vtanh.pop %v1766
        %v1771 = vtanh.pop %v1767
        %v1772 = vtanh.pop %v1768
        %v1773 = vtanh.pop %v1769
        %v1774 = vadd.f32 %v1770, 1.0
        %v1775 = vadd.f32 %v1771, 1.0
        %v1776 = vadd.f32 %v1772, 1.0
        %v1777 = vadd.f32 %v1773, 1.0
        %v1778 = vmul.f32 %v1774, 0.5
        %v1779 = vmul.f32 %v1775, 0.5
        %v1780 = vmul.f32 %v1776, 0.5
        %v1781 = vmul.f32 %v1777, 0.5
        %v1782 = vmul.f32 %v1732, %v1778
        %v1783 = vmul.f32 %v1746, %v1779
        %v1784 = vmul.f32 %v1734, %v1780
        %v1785 = vmul.f32 %v1748, %v1781
        %v1786 = vpack.c.bf16 %v1784, %v1782
        %v1787 = vpack.c.bf16 %v1785, %v1783
        %v1788 = vld [vmem:[%s633] sm:$0xf]
        %v1789 = vld [vmem:[%s633 + $0x4] sm:$0xf]
        %v1790 = vld [vmem:[%s633 + $0x8] sm:$0xf]
        %v1791 = vld [vmem:[%s633 + $0xc] sm:$0xf]
        %v1792 = vld [vmem:[%s633 + $0x10] sm:$0xf]
        %v1793 = vld [vmem:[%s633 + $0x14] sm:$0xf]
        %v1794 = vld [vmem:[%s633 + $0x18] sm:$0xf]
        %v1795 = vld [vmem:[%s633 + $0x1c] sm:$0xf]
        %v1796 = vld [vmem:[%s633 + $0x20] sm:$0xf]
        %v1797 = vld [vmem:[%s633 + $0x24] sm:$0xf]
        %v1798 = vld [vmem:[%s633 + $0x28] sm:$0xf]
        %v1799 = vld [vmem:[%s633 + $0x2c] sm:$0xf]
        %v1800 = vld [vmem:[%s633 + $0x30] sm:$0xf]
        %v1801 = vld [vmem:[%s633 + $0x34] sm:$0xf]
        %v1802 = vld [vmem:[%s633 + $0x38] sm:$0xf]
        %v1803 = vld [vmem:[%s633 + $0x3c] sm:$0xf]
        %v1804 = vld [vmem:[%s633 + $0x40] sm:$0xf]
        %v1805 = vld [vmem:[%s633 + $0x44] sm:$0xf]
        %v1806 = vld [vmem:[%s633 + $0x48] sm:$0xf]
        %v1807 = vld [vmem:[%s633 + $0x4c] sm:$0xf]
        %v1808 = vld [vmem:[%s633 + $0x50] sm:$0xf]
        %v1809 = vld [vmem:[%s633 + $0x54] sm:$0xf]
        %v1810 = vld [vmem:[%s633 + $0x58] sm:$0xf]
        %v1811 = vld [vmem:[%s633 + $0x5c] sm:$0xf]
        %v1812 = vld [vmem:[%s633 + $0x60] sm:$0xf]
        %v1813 = vld [vmem:[%s633 + $0x64] sm:$0xf]
        %v1814 = vld [vmem:[%s633 + $0x68] sm:$0xf]
        %v1815 = vld [vmem:[%s633 + $0x6c] sm:$0xf]
        %v1816 = vld [vmem:[%s633 + $0x70] sm:$0xf]
        %v1817 = vld [vmem:[%s633 + $0x74] sm:$0xf]
        %v1818 = vld [vmem:[%s633 + $0x78] sm:$0xf]
        %v1819 = vld [vmem:[%s633 + $0x7c] sm:$0xf]
        %v1820 = vld [vmem:[%s750] sm:$0x1]
        %v1822 = vperm.slane %v1820, 0
        %v1856 = vunpack.c.l.b16 %v1788
        %v1857 = vunpack.c.l.b16 %v1789
        %v1858 = vunpack.c.l.b16 %v1790
        %v1859 = vunpack.c.l.b16 %v1791
        %v1860 = vunpack.c.l.b16 %v1792
        %v1861 = vunpack.c.l.b16 %v1793
        %v1862 = vunpack.c.l.b16 %v1794
        %v1863 = vunpack.c.l.b16 %v1795
        %v1864 = vunpack.c.l.b16 %v1796
        %v1865 = vunpack.c.l.b16 %v1797
        %v1866 = vunpack.c.l.b16 %v1798
        %v1867 = vunpack.c.l.b16 %v1799
        %v1868 = vunpack.c.l.b16 %v1800
        %v1869 = vunpack.c.l.b16 %v1801
        %v1870 = vunpack.c.l.b16 %v1802
        %v1871 = vunpack.c.l.b16 %v1803
        %v1872 = vunpack.c.l.b16 %v1804
        %v1873 = vunpack.c.l.b16 %v1805
        %v1874 = vunpack.c.l.b16 %v1806
        %v1875 = vunpack.c.l.b16 %v1807
        %v1876 = vunpack.c.l.b16 %v1808
        %v1877 = vunpack.c.l.b16 %v1809
        %v1878 = vunpack.c.l.b16 %v1810
        %v1879 = vunpack.c.l.b16 %v1811
        %v1880 = vunpack.c.l.b16 %v1812
        %v1881 = vunpack.c.l.b16 %v1813
        %v1882 = vunpack.c.l.b16 %v1814
        %v1883 = vunpack.c.l.b16 %v1815
        %v1884 = vunpack.c.l.b16 %v1816
        %v1885 = vunpack.c.l.b16 %v1817
        %v1886 = vunpack.c.l.b16 %v1818
        %v1887 = vunpack.c.l.b16 %v1819
        %v1888 = vpack.c.b16 %v1857, %v1856
        %v1889 = vpack.c.b16 %v1859, %v1858
        %v1890 = vpack.c.b16 %v1861, %v1860
        %v1891 = vpack.c.b16 %v1863, %v1862
        %v1892 = vpack.c.b16 %v1865, %v1864
        %v1893 = vpack.c.b16 %v1867, %v1866
        %v1894 = vpack.c.b16 %v1869, %v1868
        %v1895 = vpack.c.b16 %v1871, %v1870
        %v1896 = vpack.c.b16 %v1873, %v1872
        %v1897 = vpack.c.b16 %v1875, %v1874
        %v1898 = vpack.c.b16 %v1877, %v1876
        %v1899 = vpack.c.b16 %v1879, %v1878
        %v1900 = vpack.c.b16 %v1881, %v1880
        %v1901 = vpack.c.b16 %v1883, %v1882
        %v1902 = vpack.c.b16 %v1885, %v1884
        %v1903 = vpack.c.b16 %v1887, %v1886
        %1920 = vmatpush.bf16.msra.mxu0 %v1895
        %1921 = vmatpush.bf16.msra.mxu0 %v1894
        %1922 = vmatpush.bf16.msra.mxu0 %v1893
        %1923 = vmatpush.bf16.msra.mxu0 %v1892
        %1924 = vmatpush.bf16.msra.mxu0 %v1891
        %1925 = vmatpush.bf16.msra.mxu0 %v1890
        %1926 = vmatpush.bf16.msra.mxu0 %v1889
        %1927 = vmatpush.bf16.msra.mxu0 %v1888
        %1928 = vmatmul.bf16.gmra.mxu0 %v1786
        %v1929 = vpop.f32.mrf.mxu0
        %v1930 = vadd.f32 %v1822, %v1929
        %v1931 = vpop.f32.mrf.mxu0
        %v1932 = vadd.f32 %v1822, %v1931
        %1933 = vdwg.mxu0
        %1934 = vmatpush.bf16.msra.mxu0 %v1903
        %1935 = vmatpush.bf16.msra.mxu0 %v1902
        %1936 = vmatpush.bf16.msra.mxu0 %v1901
        %1937 = vmatpush.bf16.msra.mxu0 %v1900
        %1938 = vmatpush.bf16.msra.mxu0 %v1899
        %1939 = vmatpush.bf16.msra.mxu0 %v1898
        %1940 = vmatpush.bf16.msra.mxu0 %v1897
        %1941 = vmatpush.bf16.msra.mxu0 %v1896
        %1942 = vmatmul.bf16.gmra.mxu0 %v1787
        %v1943 = vpop.f32.mrf.mxu0
        %v1944 = vadd.f32 %v1930, %v1943
        %v1945 = vpop.f32.mrf.mxu0
        %v1946 = vadd.f32 %v1932, %v1945
        %1947 = vdwg.mxu0
        %v1948 = vadd.f32 %v1944, %v1617
        %v1949 = vadd.f32 %v1946, %v1618
        %v1950 = vld [vmem:[%s753] sm:$0x1]
        %v1951 = vld [vmem:[%s756] sm:$0x1]
        %1952 = vadd.xlane.f32.xlu0 %v1948
        %v1953 = vpop.xlane.xlu0 %1952
        %1954 = vadd.xlane.f32.xlu0 %v1949
        %v1955 = vpop.xlane.xlu0 %1954
        %v1956 = vmul.f32 %v1953, %v1572
        %v1957 = vmul.f32 %v1955, %v1572
        %v1958 = vsub.f32 %v1948, %v1956
        %v1959 = vsub.f32 %v1949, %v1957
        %v1960 = vmul.f32 %v1958, %v1958
        %v1961 = vmul.f32 %v1959, %v1959
        %1962 = vadd.xlane.f32.xlu0 %v1960
        %v1963 = vpop.xlane.xlu0 %1962
        %1964 = vadd.xlane.f32.xlu0 %v1961
        %v1965 = vpop.xlane.xlu0 %1964
        %v1966 = vmul.f32 %v1963, %v1572
        %v1967 = vmul.f32 %v1965, %v1572
        %v1968 = vadd.f32 %v1966, 1e-12
        %v1969 = vadd.f32 %v1967, 1e-12
        %v1970 = vrsqrt.pop %v1968
        %v1971 = vmul.f32 %v1970, %v1968
        %v1972 = vmul.f32 %v1971, %v1970
        %v1973 = vmul.f32 0.5, %v1972
        %v1974 = vsub.f32 1.5, %v1973
        %v1975 = vmul.f32 %v1970, %v1974
        %vm1976 = vweird.f32 %v1968
        %vm1977 = vweird.f32 %v1970
        %vm1978 = vmor %vm1976, %vm1977
        %v1979 = vsel %vm1978, %v1970, %v1975
        %v1980 = vrsqrt.pop %v1969
        %v1981 = vmul.f32 %v1980, %v1969
        %v1982 = vmul.f32 %v1981, %v1980
        %v1983 = vmul.f32 0.5, %v1982
        %v1984 = vsub.f32 1.5, %v1983
        %v1985 = vmul.f32 %v1980, %v1984
        %vm1986 = vweird.f32 %v1969
        %vm1987 = vweird.f32 %v1980
        %vm1988 = vmor %vm1986, %vm1987
        %v1989 = vsel %vm1988, %v1980, %v1985
        %v1990 = vmul.f32 %v1958, %v1979
        %v1991 = vmul.f32 %v1959, %v1989
        %v1993 = vperm.slane %v1950, 0
        %v1995 = vmul.f32 %v1990, %v1993
        %v1996 = vmul.f32 %v1991, %v1993
        %v1998 = vperm.slane %v1951, 0
        %v2000 = vadd.f32 %v1995, %v1998
        %v2001 = vadd.f32 %v1996, %v1998
        %2002 = vst [vmem:[#allocation2] sm:$0xff] %v2000
        %2003 = vst [vmem:[#allocation2 + $0x8] sm:$0xff] %v2001
        %p2004 = scmp.eq.s32.totalorder %s35, 1
        // Predicated region
        $region101: #{forward.1} parent=87 // pred_check
          %p2005 = pneg %p2004
        $region102: #{forward.1} parent=87 // pred_check_branch
          %2007 = sbr.rel (%p2005) target = $region104
        $region103: #{forward.1} parent=87 // pred_region
          %v2008 = vld [vmem:[%s2] sm:$0xff]
          %v2009 = vld [vmem:[%s2 + $0x8] sm:$0xff]
          %2011 = vset.pattern.permute.xlu0 0
          %2012 = vperm.xlu0 %2011, %v2008
          %v2013 = vpop.permute.xlu0 %2012
          %2016 = vset.pattern.permute.xlu0 0
          %2017 = vperm.xlu0 %2016, %v2009
          %v2018 = vpop.permute.xlu0 %2017
          %v2020 = vmul.f32 %v2000, %v2013
          %v2021 = vmul.f32 %v2001, %v2018
          %v2022 = vrot.slane %v2020, 4
          %v2023 = vadd.f32 %v2020, %v2022
          %v2024 = vrot.slane %v2023, 2
          %v2025 = vadd.f32 %v2023, %v2024
          %v2026 = vrot.slane %v2025, 1
          %v2027 = vadd.f32 %v2025, %v2026
          %v2028 = vrot.slane %v2021, 4
          %v2029 = vadd.f32 %v2021, %v2028
          %v2030 = vrot.slane %v2029, 2
          %v2031 = vadd.f32 %v2029, %v2030
          %v2032 = vrot.slane %v2031, 1
          %v2033 = vadd.f32 %v2031, %v2032
          %vm2036 = vcmask 1041409
          %v2037 = vsel %vm2036, %v2033, %v2027
          %2039 = vst [vmem:[#allocation8] sm:$0x3] %v2037
        $region104: #{forward.1} parent=87 // pred_fallthru
          _
        // Predicated region
        $region105: #{forward.1} parent=87 // pred_check
          %p2040 = pneg %p465
        $region106: #{forward.1} parent=87 // pred_check_branch
          %2042 = sbr.rel (%p2040) target = $region108
        $region107: #{forward.1} parent=87 // pred_region
          %2044 = vsyncadd [#allocation5], 0
          %s2046 = sshll.u32 [#allocation8], 4
          %s2047 = int_to_ptr.vmem [resolvable:$true] %s2046
          %s2048 = sshll.u32 %s17, 4
          %s2049 = int_to_ptr.hbm [resolvable:$true] %s2048
          %2051 = dma.vmem_to_hbm [thread:$0]  %s2047, 32, %s2049, [#allocation5]
        $region108: #{forward.1} parent=87 // pred_fallthru
          _
        // Predicated region
        $region109: #{forward.1} parent=87 // pred_check
          %p2052 = pneg %p465
        $region110: #{forward.1} parent=87 // pred_check_branch
          %2054 = sbr.rel (%p2052) target = $region112
        $region111: #{forward.1} parent=87 // pred_region
          %2056 = dma.done [#allocation5], 32
        $region112: #{forward.1} parent=87 // pred_fallthru
          _
      $region88: #{forward.1} parent=5 // pred_fallthru
        _
      %p2057 = scmp.le.s32.totalorder 2, %s30
      // Predicated region
      $region113: #{forward.1} parent=5 // pred_check
        %p2058 = pneg %p2057
      $region114: #{forward.1} parent=5 // pred_check_branch
        %2060 = sbr.rel (%p2058) target = $region116
      $region115: #{forward.1} parent=5 // pred_region
        %s2061 = ssub.s32 %s30, 2
      $region116: #{forward.1} parent=5 // pred_fallthru
        _
    $region6: #{forward.1} parent=1 // loop_footer
      %s34 = sadd.s32 1, %s30
    $region7: #{forward.1} parent=1 // loop_footer_branch
      %29 = sbr.rel target = $region3
    $region8: #{forward.1} parent=1 // loop_exit
      _
    %2062 = vsyncpa [#allocation4], 1
    %s2063 = scalar_lea.sflag [#allocation4], 1
    %2064 = vsyncpa %s2063, 1
    %2065 = vsyncpa [#allocation7], 1
    %s2066 = scalar_lea.sflag [#allocation7], 1
    %2067 = vsyncpa %s2066, 1
    %2068 = vsyncpa [#allocation5], 1
    %s2069 = scalar_lea.sflag [#allocation5], 1
    %2070 = vsyncpa %s2069, 1

</llo_original>
